<compile_context>
chip_gen: v7x
topology: tpu7x:2x2x1
jax: 0.10.0
libtpu: 0.0.40
codegen_flags: <defaults>
</compile_context>

<pallas_src>
import functools

import jax
import jax.numpy as jnp
from jax import lax
from jax.experimental import pallas as pl
from jax.experimental.pallas import tpu as pltpu


# ---------------------------------------------------------------------------
# Pallas kernel
# ---------------------------------------------------------------------------
def _attn_kernel(x_ref, avg_ref, wqkv_ref, bqkv_ref, wp_ref, bp_ref,
                 o_ref, q_sc, k_sc, v_sc, *, eps):
    """Grid = (batch, query-tile).

    x_ref:    (1, C, HW)   input image (caller dtype), resident across q-tiles
    avg_ref:  (C, C) f32   group-averaging matrix (1/(cg*HW) within a group)
    wqkv_ref: (3C, C) bf16 fused q/k/v 1x1-conv weight (scale & affine folded)
    bqkv_ref: (3C, 1) f32  fused bias (scale & affine folded)
    wp_ref:   (C, C) bf16  proj_out weight;  bp_ref: (C, 1) f32 bias
    o_ref:    (1, C, TQ)   output tile: x + proj_out(attn(norm(x)))
    q_sc/k_sc/v_sc: (C, HW) bf16 VMEM scratch, persist across q-tiles
    """
    C = x_ref.shape[1]
    tq = o_ref.shape[2]
    qi = pl.program_id(1)

    # ---- Phase 1 (first q-tile of each image): GroupNorm + fused QKV ----
    @pl.when(qi == 0)
    def _():
        x = x_ref[0].astype(jnp.float32)                       # (C, HW) f32
        s1 = jnp.sum(x, axis=1, keepdims=True)                 # (C, 1)
        s2 = jnp.sum(x * x, axis=1, keepdims=True)             # (C, 1)
        # group mean / E[x^2] broadcast back per channel via one matmul each
        mean_c = jnp.dot(avg_ref[...], s1, preferred_element_type=jnp.float32)
        ex2_c = jnp.dot(avg_ref[...], s2, preferred_element_type=jnp.float32)
        rstd_c = lax.rsqrt(ex2_c - mean_c * mean_c + eps)
        # gamma/beta are folded into wqkv/bqkv, so only normalize here.
        h = ((x - mean_c) * rstd_c).astype(jnp.bfloat16)       # (C, HW) bf16
        qkv = jnp.dot(wqkv_ref[...], h,
                      preferred_element_type=jnp.float32) + bqkv_ref[...]
        q_sc[...] = qkv[0:C].astype(jnp.bfloat16)              # scale folded in
        k_sc[...] = qkv[C:2 * C].astype(jnp.bfloat16)
        v_sc[...] = qkv[2 * C:3 * C].astype(jnp.bfloat16)

    # ---- Phase 2 (every q-tile): attention + proj_out + residual ----
    qs = pl.multiple_of(qi * tq, tq)
    q_blk = q_sc[:, pl.ds(qs, tq)]                             # (C, TQ) bf16

    # logits[i, j] = sum_c q[c, i] * k[c, j]   (no q transpose materialized)
    logits = lax.dot_general(q_blk, k_sc[...],
                             (((0,), (0,)), ((), ())),
                             preferred_element_type=jnp.float32)   # (TQ, HW)

    # stable softmax over the key (lane) axis, f32 stats
    m = jnp.max(logits, axis=1, keepdims=True)
    p = jnp.exp(logits - m)
    denom = jnp.sum(p, axis=1, keepdims=True)
    attn = (p * pl.reciprocal(denom, approx=True)).astype(jnp.bfloat16)

    # out[c, i] = sum_j v[c, j] * attn[i, j]   (bf16 operands, f32 accum)
    out_blk = lax.dot_general(v_sc[...], attn,
                              (((1,), (1,)), ((), ())),
                              preferred_element_type=jnp.float32)  # (C, TQ)

    y = jnp.dot(wp_ref[...], out_blk.astype(jnp.bfloat16),
                preferred_element_type=jnp.float32) + bp_ref[...]  # (C, TQ)

    x_blk = x_ref[0, :, pl.ds(qs, tq)].astype(jnp.float32)
    o_ref[0] = (x_blk + y).astype(o_ref.dtype)


# ---------------------------------------------------------------------------
# Wrapper: parameter folding, tiling choice, pallas_call plumbing
# ---------------------------------------------------------------------------
def _choose_tq(hw, tq_max=512):
    """Largest multiple of 128 that divides HW and is <= tq_max; else HW."""
    best = None
    for t in range(128, min(hw, tq_max) + 1, 128):
        if hw % t == 0:
            best = t
    return best if best is not None else hw


def attn_block_forward(params, x_nchw, *, num_groups=2, eps=1e-6, tq_max=512):
    N, C, H, W = x_nchw.shape
    HW = H * W
    assert C % num_groups == 0
    cg = C // num_groups
    x3 = x_nchw.reshape(N, C, HW)                    # free reshape, stays NCHW

    f32 = jnp.float32
    gamma = params["g"].astype(f32).reshape(C)
    beta = params["be"].astype(f32).reshape(C)
    scale = float(C) ** 0.5                          # matches torch.pow(c, 0.5)

    def w2d(a):
        return a.reshape(C, C).astype(f32)

    # Fold the attention scale into wq/bq (trace-time, exact).
    wq = w2d(params["wq"]) * scale
    bq = params["bq"].astype(f32) * scale
    wk, bk = w2d(params["wk"]), params["bk"].astype(f32)
    wv, bv = w2d(params["wv"]), params["bv"].astype(f32)

    # Fuse q/k/v into one (3C, C) weight; fold the GroupNorm affine
    # (h = xhat*gamma + beta) into it:  W@h + b = (W*gamma)@xhat + (W@beta + b)
    w_qkv = jnp.concatenate([wq, wk, wv], axis=0)              # (3C, C) f32
    b_qkv = jnp.concatenate([bq, bk, bv], axis=0)              # (3C,)   f32
    b_qkv = (w_qkv @ beta + b_qkv).reshape(3 * C, 1)           # fold beta
    w_qkv = (w_qkv * gamma[None, :]).astype(jnp.bfloat16)      # fold gamma, bf16

    wp = w2d(params["wp"]).astype(jnp.bfloat16)
    bp = params["bp"].astype(f32).reshape(C, 1)

    # Group-averaging matrix: (avg @ s)[c] = mean over c's group of s / HW.
    ch = jnp.arange(C)
    same_group = (ch[:, None] // cg) == (ch[None, :] // cg)
    avg = same_group.astype(f32) / float(cg * HW)              # (C, C)

    TQ = _choose_tq(HW, tq_max)
    NQ = HW // TQ

    # Explicit VMEM budget (sized from C, HW, TQ); clamp to v7x-safe 64 MiB.
    # TODO(synk): for extremely large C*HW (qkv scratch or (TQ,HW) logits not
    # fitting 64 MiB) the key axis would also need flash-style tiling.
    isz = jnp.dtype(x_nchw.dtype).itemsize
    est = (2 * C * HW * isz                       # x tile (double-buffered)
           + 2 * C * TQ * isz                     # out tile (double-buffered)
           + 2 * (3 * C * C * 2 + C * C * 2 + C * C * 4 + 3 * C * 4 + C * 4)
           + 3 * C * HW * 2                       # q/k/v bf16 scratch
           + 3 * TQ * HW * 4 + TQ * HW * 2        # logits / exp / attn slabs
           + 4 * C * TQ * 4)                      # out_blk / y slabs
    vmem_limit = int(max(32 << 20, min(int(est * 1.5) + (2 << 20), 64 << 20)))

    kern = functools.partial(_attn_kernel, eps=eps)

    def full(shape):
        return pl.BlockSpec(shape, lambda b, qi, _n=len(shape): (0,) * _n)

    out = pl.pallas_call(
        kern,
        out_shape=jax.ShapeDtypeStruct((N, C, HW), x_nchw.dtype),
        grid=(N, NQ),
        in_specs=[
            pl.BlockSpec((1, C, HW), lambda b, qi: (b, 0, 0)),   # x (resident)
            full((C, C)),                                        # avg
            full((3 * C, C)),                                    # w_qkv (bf16)
            full((3 * C, 1)),                                    # b_qkv
            full((C, C)),                                        # wp (bf16)
            full((C, 1)),                                        # bp
        ],
        out_specs=pl.BlockSpec((1, C, TQ), lambda b, qi: (b, 0, qi)),
        scratch_shapes=[pltpu.VMEM((C, HW), jnp.bfloat16)] * 3,  # q, k, v
        compiler_params=pltpu.CompilerParams(
            dimension_semantics=("parallel", "arbitrary"),
            vmem_limit_bytes=vmem_limit),
    )(x3, avg, w_qkv, b_qkv, wp, bp)
    return out.reshape(N, C, H, W)


# ---------------------------------------------------------------------------
# Pure-JAX reference (correctness check only)
# ---------------------------------------------------------------------------
def _ref_forward(params, x_nchw, *, num_groups=2, eps=1e-6):
    x = x_nchw.astype(jnp.float32)
    N, C, H, W = x.shape
    xg = x.reshape(N, num_groups, C // num_groups, H, W)
    mean = jnp.mean(xg, axis=(2, 3, 4), keepdims=True)
    var = jnp.var(xg, axis=(2, 3, 4), keepdims=True)
    h = ((xg - mean) / jnp.sqrt(var + eps)).reshape(N, C, H, W)
    h = h * params["g"][None, :, None, None] + params["be"][None, :, None, None]
    hf = h.reshape(N, C, H * W)

    def conv1x1(t, w, b):
        return (jnp.einsum("oc,ncp->nop", w[:, :, 0, 0], t, precision="highest")
                + b[None, :, None])

    q = conv1x1(hf, params["wq"], params["bq"])
    k = conv1x1(hf, params["wk"], params["bk"])
    v = conv1x1(hf, params["wv"], params["bv"])
    logits = jnp.einsum("ncq,nck->nqk", q, k, precision="highest") * (float(C) ** 0.5)
    attn = jax.nn.softmax(logits, axis=2)
    out = jnp.einsum("nqk,nck->ncq", attn, v, precision="highest")
    y = conv1x1(out, params["wp"], params["bp"])
    return x + y.reshape(N, C, H, W)


# ---------------------------------------------------------------------------
if __name__ == "__main__":
    key = jax.random.PRNGKey(0)
    N, C, H, W = 2, 16, 16, 16          # num_groups=2 divides C

    ks = jax.random.split(key, 12)
    rnd = lambda k, shape, s=0.1: s * jax.random.normal(k, shape, jnp.float32)
    params = {
        "g":  1.0 + rnd(ks[0], (C,)),
        "be": rnd(ks[1], (C,)),
        "wq": rnd(ks[2], (C, C, 1, 1)),
        "bq": rnd(ks[3], (C,)),
        "wk": rnd(ks[4], (C, C, 1, 1)),
        "bk": rnd(ks[5], (C,)),
        "wv": rnd(ks[6], (C, C, 1, 1)),
        "bv": rnd(ks[7], (C,)),
        "wp": rnd(ks[8], (C, C, 1, 1)),
        "bp": rnd(ks[9], (C,)),
    }
    x = jax.random.normal(ks[10], (N, C, H, W), jnp.float32)

    out = attn_block_forward(params, x)
    out = jax.block_until_ready(out)
    assert out.shape == (N, C, H, W)

    ref = _ref_forward(params, x)
    max_err = float(jnp.max(jnp.abs(out - ref)))
    # bf16-MXU path (f32 accumulation) + approx softmax reciprocal tolerance
    assert max_err < 2e-2, f"mismatch vs reference: {max_err}"
    print("KERNEL_OK")
</pallas_src>

<mosaic_0001>
module attributes {stable_mosaic.version = 11 : i64} {
  func.func @_attn_kernel(%arg0: i32, %arg1: i32, %arg2: memref<1x16x256xf32, #tpu.memory_space<vmem>>, %arg3: memref<16x16xf32, #tpu.memory_space<vmem>>, %arg4: memref<48x16xbf16, #tpu.memory_space<vmem>>, %arg5: memref<48x1xf32, #tpu.memory_space<vmem>>, %arg6: memref<16x16xbf16, #tpu.memory_space<vmem>>, %arg7: memref<16x1xf32, #tpu.memory_space<vmem>>, %arg8: memref<1x16x256xf32, #tpu.memory_space<vmem>>, %arg9: memref<16x256xbf16, #tpu.memory_space<vmem>>, %arg10: memref<16x256xbf16, #tpu.memory_space<vmem>>, %arg11: memref<16x256xbf16, #tpu.memory_space<vmem>>) attributes {dimension_semantics = [#tpu.dimension_semantics<parallel>, #tpu.dimension_semantics<arbitrary>], iteration_bounds = array<i64: 2, 1>, scalar_prefetch = 0 : i64, scratch_operands = 3 : i64, tpu.core_type = #tpu.core_type<tc>, window_params = [{transform_indices = @transform_0, window_bounds = array<i64: 1, 16, 256>}, {pipeline_mode = #tpu.pipeline_mode<synchronous>, transform_indices = @transform_1, window_bounds = array<i64: 16, 16>}, {pipeline_mode = #tpu.pipeline_mode<synchronous>, transform_indices = @transform_2, window_bounds = array<i64: 48, 16>}, {pipeline_mode = #tpu.pipeline_mode<synchronous>, transform_indices = @transform_3, window_bounds = array<i64: 48, 1>}, {pipeline_mode = #tpu.pipeline_mode<synchronous>, transform_indices = @transform_4, window_bounds = array<i64: 16, 16>}, {pipeline_mode = #tpu.pipeline_mode<synchronous>, transform_indices = @transform_5, window_bounds = array<i64: 16, 1>}, {transform_indices = @transform_6, window_bounds = array<i64: 1, 16, 256>}]} {
    %c0_i32 = arith.constant 0 : i32
    %0 = arith.cmpi eq, %arg1, %c0_i32 : i32
    %1 = arith.extui %0 : i1 to i32
    %c0_i32_0 = arith.constant 0 : i32
    %2 = arith.cmpi ne, %1, %c0_i32_0 : i32
    scf.if %2 {
      %c0_18 = arith.constant 0 : index
      %c0_19 = arith.constant 0 : index
      %c0_20 = arith.constant 0 : index
      %35 = vector.load %arg2[%c0_18, %c0_19, %c0_20] : memref<1x16x256xf32, #tpu.memory_space<vmem>>, vector<1x16x256xf32>
      %36 = vector.shape_cast %35 : vector<1x16x256xf32> to vector<16x256xf32>
      %cst_21 = arith.constant dense<0.000000e+00> : vector<16xf32>
      %37 = vector.multi_reduction <add>, %36, %cst_21 [1] : vector<16x256xf32> to vector<16xf32>
      %38 = vector.shape_cast %37 : vector<16xf32> to vector<16x1xf32>
      %39 = arith.mulf %36, %36 : vector<16x256xf32>
      %cst_22 = arith.constant dense<0.000000e+00> : vector<16xf32>
      %40 = vector.multi_reduction <add>, %39, %cst_22 [1] : vector<16x256xf32> to vector<16xf32>
      %41 = vector.shape_cast %40 : vector<16xf32> to vector<16x1xf32>
      %c0_23 = arith.constant 0 : index
      %c0_24 = arith.constant 0 : index
      %42 = vector.load %arg3[%c0_23, %c0_24] : memref<16x16xf32, #tpu.memory_space<vmem>>, vector<16x16xf32>
      %cst_25 = arith.constant dense<0.000000e+00> : vector<16x1xf32>
      %43 = tpu.matmul %42, %38, %cst_25 {dimension_numbers = #tpu.dot_dimension_numbers<[1], [0], [0], [1], [0, 0, 1, 1], [], []>} : vector<16x16xf32>, vector<16x1xf32>, vector<16x1xf32> -> vector<16x1xf32>
      %c0_26 = arith.constant 0 : index
      %c0_27 = arith.constant 0 : index
      %44 = vector.load %arg3[%c0_26, %c0_27] : memref<16x16xf32, #tpu.memory_space<vmem>>, vector<16x16xf32>
      %cst_28 = arith.constant dense<0.000000e+00> : vector<16x1xf32>
      %45 = tpu.matmul %44, %41, %cst_28 {dimension_numbers = #tpu.dot_dimension_numbers<[1], [0], [0], [1], [0, 0, 1, 1], [], []>} : vector<16x16xf32>, vector<16x1xf32>, vector<16x1xf32> -> vector<16x1xf32>
      %46 = arith.mulf %43, %43 : vector<16x1xf32>
      %47 = arith.subf %45, %46 : vector<16x1xf32>
      %cst_29 = arith.constant 9.99999997E-7 : f32
      %48 = vector.broadcast %cst_29 : f32 to vector<16x1xf32>
      %49 = arith.addf %47, %48 : vector<16x1xf32>
      %50 = math.rsqrt %49 : vector<16x1xf32>
      %51 = vector.broadcast %43 : vector<16x1xf32> to vector<16x256xf32>
      %52 = arith.subf %36, %51 : vector<16x256xf32>
      %53 = vector.broadcast %50 : vector<16x1xf32> to vector<16x256xf32>
      %54 = arith.mulf %52, %53 : vector<16x256xf32>
      %55 = arith.truncf %54 : vector<16x256xf32> to vector<16x256xbf16>
      %c0_30 = arith.constant 0 : index
      %c0_31 = arith.constant 0 : index
      %56 = vector.load %arg4[%c0_30, %c0_31] : memref<48x16xbf16, #tpu.memory_space<vmem>>, vector<48x16xbf16>
      %cst_32 = arith.constant dense<0.000000e+00> : vector<48x256xf32>
      %57 = tpu.matmul %56, %55, %cst_32 {dimension_numbers = #tpu.dot_dimension_numbers<[1], [0], [0], [1], [0, 0, 1, 1], [], []>} : vector<48x16xbf16>, vector<16x256xbf16>, vector<48x256xf32> -> vector<48x256xf32>
      %c0_33 = arith.constant 0 : index
      %c0_34 = arith.constant 0 : index
      %58 = vector.load %arg5[%c0_33, %c0_34] : memref<48x1xf32, #tpu.memory_space<vmem>>, vector<48x1xf32>
      %59 = vector.broadcast %58 : vector<48x1xf32> to vector<48x256xf32>
      %60 = arith.addf %57, %59 : vector<48x256xf32>
      %61 = vector.extract_strided_slice %60 {offsets = [0, 0], sizes = [16, 256], strides = [1, 1]} : vector<48x256xf32> to vector<16x256xf32>
      %62 = arith.truncf %61 : vector<16x256xf32> to vector<16x256xbf16>
      %c0_35 = arith.constant 0 : index
      %c0_36 = arith.constant 0 : index
      %63 = vector.load %arg9[%c0_35, %c0_36] : memref<16x256xbf16, #tpu.memory_space<vmem>>, vector<16x256xbf16>
      tpu.vector_store %arg9[%c0_35, %c0_36], %62 {strides = array<i32>} : memref<16x256xbf16, #tpu.memory_space<vmem>>, vector<16x256xbf16>,
      %64 = vector.extract_strided_slice %60 {offsets = [16, 0], sizes = [16, 256], strides = [1, 1]} : vector<48x256xf32> to vector<16x256xf32>
      %65 = arith.truncf %64 : vector<16x256xf32> to vector<16x256xbf16>
      %c0_37 = arith.constant 0 : index
      %c0_38 = arith.constant 0 : index
      %66 = vector.load %arg10[%c0_37, %c0_38] : memref<16x256xbf16, #tpu.memory_space<vmem>>, vector<16x256xbf16>
      tpu.vector_store %arg10[%c0_37, %c0_38], %65 {strides = array<i32>} : memref<16x256xbf16, #tpu.memory_space<vmem>>, vector<16x256xbf16>,
      %67 = vector.extract_strided_slice %60 {offsets = [32, 0], sizes = [16, 256], strides = [1, 1]} : vector<48x256xf32> to vector<16x256xf32>
      %68 = arith.truncf %67 : vector<16x256xf32> to vector<16x256xbf16>
      %c0_39 = arith.constant 0 : index
      %c0_40 = arith.constant 0 : index
      %69 = vector.load %arg11[%c0_39, %c0_40] : memref<16x256xbf16, #tpu.memory_space<vmem>>, vector<16x256xbf16>
      tpu.vector_store %arg11[%c0_39, %c0_40], %68 {strides = array<i32>} : memref<16x256xbf16, #tpu.memory_space<vmem>>, vector<16x256xbf16>,
    } else {
    }
    %c256_i32 = arith.constant 256 : i32
    %3 = arith.muli %arg1, %c256_i32 : i32
    %4 = tpu.assume_multiple %3, 256 : i32
    %c0 = arith.constant 0 : index
    %5 = arith.index_cast %4 : i32 to index
    %6 = vector.load %arg9[%c0, %5] : memref<16x256xbf16, #tpu.memory_space<vmem>>, vector<16x256xbf16>
    %c0_1 = arith.constant 0 : index
    %c0_2 = arith.constant 0 : index
    %7 = vector.load %arg10[%c0_1, %c0_2] : memref<16x256xbf16, #tpu.memory_space<vmem>>, vector<16x256xbf16>
    %cst = arith.constant dense<0.000000e+00> : vector<256x256xf32>
    %8 = tpu.matmul %6, %7, %cst {dimension_numbers = #tpu.dot_dimension_numbers<[0], [0], [1], [1], [0, 1, 1, 1], [], []>} : vector<16x256xbf16>, vector<16x256xbf16>, vector<256x256xf32> -> vector<256x256xf32>
    %cst_3 = arith.constant dense<0xFF800000> : vector<256xf32>
    %9 = vector.multi_reduction <maximumf>, %8, %cst_3 [1] : vector<256x256xf32> to vector<256xf32>
    %10 = vector.shape_cast %9 : vector<256xf32> to vector<256x1xf32>
    %11 = vector.broadcast %10 : vector<256x1xf32> to vector<256x256xf32>
    %12 = arith.subf %8, %11 : vector<256x256xf32>
    %13 = math.exp %12 : vector<256x256xf32>
    %cst_4 = arith.constant dense<0.000000e+00> : vector<256xf32>
    %14 = vector.multi_reduction <add>, %13, %cst_4 [1] : vector<256x256xf32> to vector<256xf32>
    %15 = vector.shape_cast %14 : vector<256xf32> to vector<256x1xf32>
    %16 = tpu.reciprocal %15 {approx = true} : vector<256x1xf32> -> vector<256x1xf32>
    %17 = vector.broadcast %16 : vector<256x1xf32> to vector<256x256xf32>
    %18 = arith.mulf %13, %17 : vector<256x256xf32>
    %19 = arith.truncf %18 : vector<256x256xf32> to vector<256x256xbf16>
    %c0_5 = arith.constant 0 : index
    %c0_6 = arith.constant 0 : index
    %20 = vector.load %arg11[%c0_5, %c0_6] : memref<16x256xbf16, #tpu.memory_space<vmem>>, vector<16x256xbf16>
    %cst_7 = arith.constant dense<0.000000e+00> : vector<16x256xf32>
    %21 = tpu.matmul %20, %19, %cst_7 {dimension_numbers = #tpu.dot_dimension_numbers<[1], [1], [0], [0], [0, 0, 1, 0], [], []>} : vector<16x256xbf16>, vector<256x256xbf16>, vector<16x256xf32> -> vector<16x256xf32>
    %c0_8 = arith.constant 0 : index
    %c0_9 = arith.constant 0 : index
    %22 = vector.load %arg6[%c0_8, %c0_9] : memref<16x16xbf16, #tpu.memory_space<vmem>>, vector<16x16xbf16>
    %23 = arith.truncf %21 : vector<16x256xf32> to vector<16x256xbf16>
    %cst_10 = arith.constant dense<0.000000e+00> : vector<16x256xf32>
    %24 = tpu.matmul %22, %23, %cst_10 {dimension_numbers = #tpu.dot_dimension_numbers<[1], [0], [0], [1], [0, 0, 1, 1], [], []>} : vector<16x16xbf16>, vector<16x256xbf16>, vector<16x256xf32> -> vector<16x256xf32>
    %c0_11 = arith.constant 0 : index
    %c0_12 = arith.constant 0 : index
    %25 = vector.load %arg7[%c0_11, %c0_12] : memref<16x1xf32, #tpu.memory_space<vmem>>, vector<16x1xf32>
    %26 = vector.broadcast %25 : vector<16x1xf32> to vector<16x256xf32>
    %27 = arith.addf %24, %26 : vector<16x256xf32>
    %c0_13 = arith.constant 0 : index
    %c0_14 = arith.constant 0 : index
    %28 = arith.index_cast %4 : i32 to index
    %29 = vector.load %arg2[%c0_13, %c0_14, %28] : memref<1x16x256xf32, #tpu.memory_space<vmem>>, vector<1x16x256xf32>
    %30 = vector.shape_cast %29 : vector<1x16x256xf32> to vector<16x256xf32>
    %31 = arith.addf %30, %27 : vector<16x256xf32>
    %c0_15 = arith.constant 0 : index
    %c0_16 = arith.constant 0 : index
    %c0_17 = arith.constant 0 : index
    %32 = vector.load %arg8[%c0_15, %c0_16, %c0_17] : memref<1x16x256xf32, #tpu.memory_space<vmem>>, vector<1x16x256xf32>
    %33 = vector.shape_cast %32 : vector<1x16x256xf32> to vector<16x256xf32>
    %34 = vector.shape_cast %31 : vector<16x256xf32> to vector<1x16x256xf32>
    tpu.vector_store %arg8[%c0_15, %c0_16, %c0_17], %34 {strides = array<i32>} : memref<1x16x256xf32, #tpu.memory_space<vmem>>, vector<1x16x256xf32>,
    return
  }
  func.func @transform_0(%arg0: i32, %arg1: i32) -> (i32, i32, i32) {
    %c0_i32 = arith.constant 0 : i32
    %c0_i32_0 = arith.constant 0 : i32
    %c0_i32_1 = arith.constant 0 : i32
    return %arg0, %c0_i32, %c0_i32_0 : i32, i32, i32
  }
  func.func @transform_1(%arg0: i32, %arg1: i32) -> (i32, i32) {
    %c0_i32 = arith.constant 0 : i32
    %c0_i32_0 = arith.constant 0 : i32
    %c0_i32_1 = arith.constant 0 : i32
    return %c0_i32, %c0_i32_0 : i32, i32
  }
  func.func @transform_2(%arg0: i32, %arg1: i32) -> (i32, i32) {
    %c0_i32 = arith.constant 0 : i32
    %c0_i32_0 = arith.constant 0 : i32
    %c0_i32_1 = arith.constant 0 : i32
    return %c0_i32, %c0_i32_0 : i32, i32
  }
  func.func @transform_3(%arg0: i32, %arg1: i32) -> (i32, i32) {
    %c0_i32 = arith.constant 0 : i32
    %c0_i32_0 = arith.constant 0 : i32
    %c0_i32_1 = arith.constant 0 : i32
    return %c0_i32, %c0_i32_0 : i32, i32
  }
  func.func @transform_4(%arg0: i32, %arg1: i32) -> (i32, i32) {
    %c0_i32 = arith.constant 0 : i32
    %c0_i32_0 = arith.constant 0 : i32
    %c0_i32_1 = arith.constant 0 : i32
    return %c0_i32, %c0_i32_0 : i32, i32
  }
  func.func @transform_5(%arg0: i32, %arg1: i32) -> (i32, i32) {
    %c0_i32 = arith.constant 0 : i32
    %c0_i32_0 = arith.constant 0 : i32
    %c0_i32_1 = arith.constant 0 : i32
    return %c0_i32, %c0_i32_0 : i32, i32
  }
  func.func @transform_6(%arg0: i32, %arg1: i32) -> (i32, i32, i32) {
    %c0_i32 = arith.constant 0 : i32
    %c0_i32_0 = arith.constant 0 : i32
    return %arg0, %c0_i32, %arg1 : i32, i32, i32
  }
}

</mosaic_0001>

<llo_original>
// kernel: tpu_custom_call.1
$region0: #{tpu_custom_call.1}
  #allocation0 [shape = 'u32[]', space=smem, size = 0x4, offset = 0x4, fixed_abs, tag = 'smem constant byte address 0x4 - core index']
  #allocation1 [shape = 'u32[144,128]{1,0:T(1,128)}', space=vmem, size = 0x12000, scoped, tag = 'internal scratch']
  #allocation2 [shape = 'bf16[16,256]{1,0:T(16,128)(2,1)}', space=vmem, size = 0x2000, scoped, tag = 'scratch operand']
  #allocation3 [shape = 'bf16[16,256]{1,0:T(16,128)(2,1)}', space=vmem, size = 0x2000, scoped, tag = 'scratch operand']
  #allocation4 [shape = 'bf16[16,256]{1,0:T(16,128)(2,1)}', space=vmem, size = 0x2000, scoped, tag = 'scratch operand']
  %s0 = inlined_call_operand.vmem [shape: f32[2,16,256], index: 0, kind: input, shape index: {}]
  %s1 = inlined_call_operand.vmem [shape: f32[16,16], index: 1, kind: input, shape index: {}]
  %s2 = inlined_call_operand.vmem [shape: bf16[48,16], index: 2, kind: input, shape index: {}]
  %s3 = inlined_call_operand.vmem [shape: f32[48,1], index: 3, kind: input, shape index: {}]
  %s4 = inlined_call_operand.vmem [shape: bf16[16,16], index: 4, kind: input, shape index: {}]
  %s5 = inlined_call_operand.vmem [shape: f32[16,1], index: 5, kind: input, shape index: {}]
  %s6 = inlined_call_operand.hbm [shape: f32[2,16,256], index: 6, kind: output, shape index: {}]
  %s7 = sld [smem:[#allocation0]]
  $region61: #{tpu_custom_call.1} parent=0
    _
  %s9 = ssub.s32 1, %s7
  %s10 = scalar_select 0, %s9, %s7
  $region1: #{tpu_custom_call.1} parent=0
    #allocation5 [shape = 'u8[32768]{0}', space=vmem, size = 0x8000, scoped, tag = 'output window, operand 0']
    #allocation6 [shape = 's32[2]{0}', space=sflag, size = 0x8, scoped, tag = 'scoped memory for tpu_custom_call.1']
    %11 = vsyncpa [#allocation6], 0
    %s12 = scalar_lea.sflag [#allocation6], 1
    %13 = vsyncpa %s12, 0
    loop: start=0, step=1, limit=4
    $region2: #{tpu_custom_call.1} parent=1 // loop_pre_header
      _
    $region3: #{tpu_custom_call.1} parent=1 // loop_header
      %s15 = sphi 0, %s19
      %p16 = scmp.ge.s32.totalorder %s15, 4
      %s22 = sphi 0, %s34
      %s23 = sphi 0, %s30
      %s24 = sphi 0, %s22
      %s25 = sphi 0, %s23
      %s26 = sphi 0, %s24
      %s27 = sphi 0, %s25
      %s37 = sphi 0, %s39
      %s40 = sphi 0, %s37
      %s41 = sphi 0, %s40
      %s57 = sphi 0, %s41
      %s61 = sphi 0, %s61
      %s63 = sphi 0, %s61
      %s64 = sphi 0, %s63
      %s78 = sphi 0, %s64
      %s82 = sphi 0, %s82
      %s84 = sphi 0, %s82
      %s85 = sphi 0, %s84
      %s99 = sphi 0, %s85
      %s103 = sphi 0, %s103
      %s105 = sphi 0, %s103
      %s106 = sphi 0, %s105
      %s120 = sphi 0, %s106
      %s124 = sphi 0, %s124
      %s126 = sphi 0, %s124
      %s127 = sphi 0, %s126
      %s141 = sphi 0, %s127
      %s145 = sphi 0, %s145
      %s147 = sphi 0, %s145
      %s148 = sphi 0, %s147
      %s162 = sphi 0, %s148
      %s170 = sphi 0, %s172
      %s173 = sphi 0, %s170
      %s174 = sphi 0, %s173
      %s190 = sphi 0, %s174
    $region4: #{tpu_custom_call.1} parent=1 // loop_header_branch
      %18 = sbr.rel (%p16) target = $region8
    $region5: #{tpu_custom_call.1} parent=1 // loop_body
      %s20 = ssub.s32 %s15, 1
      %s21 = ssub.s32 %s15, 2
      %s28 = sadd.s32 1, %s23
      %p29 = scmp.ge.s32.totalorder %s28, 1
      %s30 = scalar_select %p29, 0, %s28
      %s31 = sadd.s32 1, %s22
      %s32 = scalar_select %p29, %s31, %s22
      %p33 = scmp.ge.s32.totalorder %s32, 2
      %s34 = scalar_select %p33, 0, %s32
      %s35 = ssub.s32 %s22, %s34
      %p36 = scmp.eq.s32.totalorder %s35, 0
      %s38 = sadd.s32 %s37, 1
      %s39 = scalar_select %p36, %s37, %s38
      %p42 = pneg %p36
      %p43 = scmp.eq.s32.totalorder %s15, 1
      %p44 = por %p42, %p43
      %p45 = scmp.ne.s32.totalorder %s37, %s40
      %p46 = scmp.eq.s32.totalorder %s15, 0
      %p47 = por %p45, %p46
      %p48 = scmp.ne.s32.totalorder %s37, %s40
      %p49 = scmp.eq.s32.totalorder %s20, 1
      %p50 = por %p48, %p49
      %p51 = scmp.ne.s32.totalorder %s40, %s41
      %p52 = scmp.eq.s32.totalorder %s20, 0
      %p53 = por %p51, %p52
      %p54 = scmp.ne.s32.totalorder %s40, %s41
      %p55 = scmp.eq.s32.totalorder %s21, 1
      %p56 = por %p54, %p55
      %p58 = scmp.ne.s32.totalorder %s41, %s57
      %p59 = scmp.eq.s32.totalorder %s21, 0
      %p60 = por %p58, %p59
      %s62 = sadd.s32 %s61, 1
      %p65 = scmp.eq.s32.totalorder %s15, 1
      %p66 = scmp.ne.s32.totalorder %s61, %s63
      %p67 = scmp.eq.s32.totalorder %s15, 0
      %p68 = por %p66, %p67
      %p69 = scmp.ne.s32.totalorder %s61, %s63
      %p70 = scmp.eq.s32.totalorder %s20, 1
      %p71 = por %p69, %p70
      %p72 = scmp.ne.s32.totalorder %s63, %s64
      %p73 = scmp.eq.s32.totalorder %s20, 0
      %p74 = por %p72, %p73
      %p75 = scmp.ne.s32.totalorder %s63, %s64
      %p76 = scmp.eq.s32.totalorder %s21, 1
      %p77 = por %p75, %p76
      %p79 = scmp.ne.s32.totalorder %s64, %s78
      %p80 = scmp.eq.s32.totalorder %s21, 0
      %p81 = por %p79, %p80
      %s83 = sadd.s32 %s82, 1
      %p86 = scmp.eq.s32.totalorder %s15, 1
      %p87 = scmp.ne.s32.totalorder %s82, %s84
      %p88 = scmp.eq.s32.totalorder %s15, 0
      %p89 = por %p87, %p88
      %p90 = scmp.ne.s32.totalorder %s82, %s84
      %p91 = scmp.eq.s32.totalorder %s20, 1
      %p92 = por %p90, %p91
      %p93 = scmp.ne.s32.totalorder %s84, %s85
      %p94 = scmp.eq.s32.totalorder %s20, 0
      %p95 = por %p93, %p94
      %p96 = scmp.ne.s32.totalorder %s84, %s85
      %p97 = scmp.eq.s32.totalorder %s21, 1
      %p98 = por %p96, %p97
      %p100 = scmp.ne.s32.totalorder %s85, %s99
      %p101 = scmp.eq.s32.totalorder %s21, 0
      %p102 = por %p100, %p101
      %s104 = sadd.s32 %s103, 1
      %p107 = scmp.eq.s32.totalorder %s15, 1
      %p108 = scmp.ne.s32.totalorder %s103, %s105
      %p109 = scmp.eq.s32.totalorder %s15, 0
      %p110 = por %p108, %p109
      %p111 = scmp.ne.s32.totalorder %s103, %s105
      %p112 = scmp.eq.s32.totalorder %s20, 1
      %p113 = por %p111, %p112
      %p114 = scmp.ne.s32.totalorder %s105, %s106
      %p115 = scmp.eq.s32.totalorder %s20, 0
      %p116 = por %p114, %p115
      %p117 = scmp.ne.s32.totalorder %s105, %s106
      %p118 = scmp.eq.s32.totalorder %s21, 1
      %p119 = por %p117, %p118
      %p121 = scmp.ne.s32.totalorder %s106, %s120
      %p122 = scmp.eq.s32.totalorder %s21, 0
      %p123 = por %p121, %p122
      %s125 = sadd.s32 %s124, 1
      %p128 = scmp.eq.s32.totalorder %s15, 1
      %p129 = scmp.ne.s32.totalorder %s124, %s126
      %p130 = scmp.eq.s32.totalorder %s15, 0
      %p131 = por %p129, %p130
      %p132 = scmp.ne.s32.totalorder %s124, %s126
      %p133 = scmp.eq.s32.totalorder %s20, 1
      %p134 = por %p132, %p133
      %p135 = scmp.ne.s32.totalorder %s126, %s127
      %p136 = scmp.eq.s32.totalorder %s20, 0
      %p137 = por %p135, %p136
      %p138 = scmp.ne.s32.totalorder %s126, %s127
      %p139 = scmp.eq.s32.totalorder %s21, 1
      %p140 = por %p138, %p139
      %p142 = scmp.ne.s32.totalorder %s127, %s141
      %p143 = scmp.eq.s32.totalorder %s21, 0
      %p144 = por %p142, %p143
      %s146 = sadd.s32 %s145, 1
      %p149 = scmp.eq.s32.totalorder %s15, 1
      %p150 = scmp.ne.s32.totalorder %s145, %s147
      %p151 = scmp.eq.s32.totalorder %s15, 0
      %p152 = por %p150, %p151
      %p153 = scmp.ne.s32.totalorder %s145, %s147
      %p154 = scmp.eq.s32.totalorder %s20, 1
      %p155 = por %p153, %p154
      %p156 = scmp.ne.s32.totalorder %s147, %s148
      %p157 = scmp.eq.s32.totalorder %s20, 0
      %p158 = por %p156, %p157
      %p159 = scmp.ne.s32.totalorder %s147, %s148
      %p160 = scmp.eq.s32.totalorder %s21, 1
      %p161 = por %p159, %p160
      %p163 = scmp.ne.s32.totalorder %s148, %s162
      %p164 = scmp.eq.s32.totalorder %s21, 0
      %p165 = por %p163, %p164
      %s166 = ssub.s32 %s22, %s34
      %s167 = ssub.s32 %s23, %s30
      %s168 = sor.u32 %s166, %s167
      %p169 = scmp.eq.s32.totalorder %s168, 0
      %s171 = sadd.s32 %s170, 1
      %s172 = scalar_select %p169, %s170, %s171
      %p175 = pneg %p169
      %p176 = scmp.eq.s32.totalorder %s15, 1
      %p177 = por %p175, %p176
      %p178 = scmp.ne.s32.totalorder %s170, %s173
      %p179 = scmp.eq.s32.totalorder %s15, 0
      %p180 = por %p178, %p179
      %p181 = scmp.ne.s32.totalorder %s170, %s173
      %p182 = scmp.eq.s32.totalorder %s20, 1
      %p183 = por %p181, %p182
      %p184 = scmp.ne.s32.totalorder %s173, %s174
      %p185 = scmp.eq.s32.totalorder %s20, 0
      %p186 = por %p184, %p185
      %p187 = scmp.ne.s32.totalorder %s173, %s174
      %p188 = scmp.eq.s32.totalorder %s21, 1
      %p189 = por %p187, %p188
      %p191 = scmp.ne.s32.totalorder %s174, %s190
      %p192 = scmp.eq.s32.totalorder %s21, 0
      %p193 = por %p191, %p192
      %p194 = scmp.le.s32.totalorder 1, %s15
      %p195 = scmp.lt.s32.totalorder %s15, 3
      %p196 = pnand %p194, %p195
      %p197 = pneg %p196
      // Predicated region
      $region9: #{tpu_custom_call.1} parent=5 // pred_check
        _
      $region10: #{tpu_custom_call.1} parent=5 // pred_check_branch
        %199 = sbr.rel (%p196) target = $region12
      $region11: #{tpu_custom_call.1} parent=5 // pred_region
        %s200 = ssub.s32 %s15, 1
        // Predicated region
        $region13: #{tpu_custom_call.1} parent=11 // pred_check
          %p201 = pneg %p74
        $region14: #{tpu_custom_call.1} parent=11 // pred_check_branch
          %203 = sbr.rel (%p201) target = $region16
        $region15: #{tpu_custom_call.1} parent=11 // pred_region
          _
        $region16: #{tpu_custom_call.1} parent=11 // pred_fallthru
          _
        // Predicated region
        $region17: #{tpu_custom_call.1} parent=11 // pred_check
          %p204 = pneg %p95
        $region18: #{tpu_custom_call.1} parent=11 // pred_check_branch
          %206 = sbr.rel (%p204) target = $region20
        $region19: #{tpu_custom_call.1} parent=11 // pred_region
          _
        $region20: #{tpu_custom_call.1} parent=11 // pred_fallthru
          _
        // Predicated region
        $region21: #{tpu_custom_call.1} parent=11 // pred_check
          %p207 = pneg %p116
        $region22: #{tpu_custom_call.1} parent=11 // pred_check_branch
          %209 = sbr.rel (%p207) target = $region24
        $region23: #{tpu_custom_call.1} parent=11 // pred_region
          _
        $region24: #{tpu_custom_call.1} parent=11 // pred_fallthru
          _
        // Predicated region
        $region25: #{tpu_custom_call.1} parent=11 // pred_check
          %p210 = pneg %p137
        $region26: #{tpu_custom_call.1} parent=11 // pred_check_branch
          %212 = sbr.rel (%p210) target = $region28
        $region27: #{tpu_custom_call.1} parent=11 // pred_region
          _
        $region28: #{tpu_custom_call.1} parent=11 // pred_fallthru
          _
        // Predicated region
        $region29: #{tpu_custom_call.1} parent=11 // pred_check
          %p213 = pneg %p158
        $region30: #{tpu_custom_call.1} parent=11 // pred_check_branch
          %215 = sbr.rel (%p213) target = $region32
        $region31: #{tpu_custom_call.1} parent=11 // pred_region
          _
        $region32: #{tpu_custom_call.1} parent=11 // pred_fallthru
          _
      $region12: #{tpu_custom_call.1} parent=5 // pred_fallthru
        _
      %p216 = scmp.lt.s32.totalorder %s15, 2
      // Predicated region
      $region33: #{tpu_custom_call.1} parent=5 // pred_check
        %p217 = pneg %p216
      $region34: #{tpu_custom_call.1} parent=5 // pred_check_branch
        %219 = sbr.rel (%p217) target = $region36
      $region35: #{tpu_custom_call.1} parent=5 // pred_region
        // Predicated region
        $region37: #{tpu_custom_call.1} parent=35 // pred_check
          %p220 = pneg %p47
        $region38: #{tpu_custom_call.1} parent=35 // pred_check_branch
          %222 = sbr.rel (%p220) target = $region40
        $region39: #{tpu_custom_call.1} parent=35 // pred_region
          %p223 = scmp.lt.s32.totalorder %s22, 1
          %s224 = scalar_select %p223, %s22, 1
          %s225 = smul.addr %s224, 4
          %s226 = smul.addr %s225, 8
          %s227 = scalar_lea.vmem %s0, %s226
        $region40: #{tpu_custom_call.1} parent=35 // pred_fallthru
          _
      $region36: #{tpu_custom_call.1} parent=5 // pred_fallthru
        _
      %p228 = scmp.le.s32.totalorder 1, %s15
      %p229 = scmp.lt.s32.totalorder %s15, 3
      %p230 = pnand %p228, %p229
      %p231 = pneg %p230
      // Predicated region
      $region41: #{tpu_custom_call.1} parent=5 // pred_check
        _
      $region42: #{tpu_custom_call.1} parent=5 // pred_check_branch
        %233 = sbr.rel (%p230) target = $region44
      $region43: #{tpu_custom_call.1} parent=5 // pred_region
        %s234 = ssub.s32 %s15, 1
        %p235 = scmp.lt.s32.totalorder %s24, 1
        %s236 = scalar_select %p235, %s24, 1
        %s237 = smul.addr %s236, 4
        %s238 = smul.addr %s237, 8
        %s239 = scalar_lea.vmem %s0, %s238
        %p240 = pneg %p53
        %p241 = pneg %p50
        %p242 = pneg %p74
        %p243 = pneg %p71
        %p244 = pneg %p95
        %p245 = pneg %p92
        %p246 = pneg %p116
        %p247 = pneg %p113
        %p248 = pneg %p137
        %p249 = pneg %p134
        %p250 = pneg %p158
        %p251 = pneg %p155
        %p252 = pneg %p186
        %p253 = pneg %p183
        %s254 = sand.u32 %s173, 1
        %s255 = scalar_lea.sflag [#allocation6], %s254
        %s256 = sand.u32 %s173, 1
        %s257 = smul.addr %s256, 32
        %s258 = scalar_lea.vmem [#allocation5], %s257
        %p259 = scmp.lt.s32.totalorder %s24, 1
        %s260 = scalar_select %p259, %s24, 1
        %s261 = smul.addr %s260, 4
        %s262 = smul.addr %s261, 8
        %s263 = scalar_lea.vmem %s0, %s262
        %s264 = smul.u32 2, %s25
        %p266 = scmp.eq.s32.totalorder %s25, 0
        // Predicated region
        $region45: #{tpu_custom_call.1} parent=43 // pred_check
          %p267 = pneg %p266
        $region46: #{tpu_custom_call.1} parent=43 // pred_check_branch
          %269 = sbr.rel (%p267) target = $region48
        $region47: #{tpu_custom_call.1} parent=43 // pred_region
          %v270 = vld [vmem:[%s263] sm:$0xff]
          %v271 = vld [vmem:[%s263 + $0x8] sm:$0xff]
          %v272 = vld [vmem:[%s263 + $0x10] sm:$0xff]
          %v273 = vld [vmem:[%s263 + $0x18] sm:$0xff]
          %v274 = vadd.f32 %v270, %v271
          %275 = vadd.xlane.f32.xlu0 %v274
          %v276 = vpop.xlane.xlu0 %275
          %v277 = vadd.f32 %v272, %v273
          %278 = vadd.xlane.f32.xlu0 %v277
          %v279 = vpop.xlane.xlu0 %278
          %v280 = vmul.f32 %v270, %v270
          %v281 = vmul.f32 %v271, %v271
          %v282 = vmul.f32 %v272, %v272
          %v283 = vmul.f32 %v273, %v273
          %v284 = vadd.f32 %v280, %v281
          %285 = vadd.xlane.f32.xlu0 %v284
          %v286 = vpop.xlane.xlu0 %285
          %v287 = vadd.f32 %v282, %v283
          %288 = vadd.xlane.f32.xlu0 %v287
          %v289 = vpop.xlane.xlu0 %288
          %v290 = vld [vmem:[%s1] sm:$0xff]
          %v291 = vld [vmem:[%s1 + $0x8] sm:$0xff]
          %vm292 = vcmask 130048
          %v294 = vsel %vm292, %v290, 0
          %v297 = vsel %vm292, %v291, 0
          %299 = vmatprep.subr.mxu0 0.0
          %300 = vmatpush1.msra.mxu0 %v276
          %301 = vmatprep.subr.mxu0 0.0
          %302 = vmatpush1.msra.mxu0 %v279
          %303 = vmatprep.subr.mxu0 0.0
          %304 = vmatpush1.msra.mxu0 0.0
          %305 = vmatprep.subr.mxu0 0.0
          %306 = vmatpush1.msra.mxu0 0.0
          %307 = vmatprep.subr.mxu0 0.0
          %308 = vmatpush1.msra.mxu0 0.0
          %309 = vmatprep.subr.mxu0 0.0
          %310 = vmatpush1.msra.mxu0 0.0
          %311 = vmatprep.subr.mxu0 0.0
          %312 = vmatpush1.msra.mxu0 0.0
          %313 = vmatprep.subr.mxu0 0.0
          %314 = vmatpush1.msra.mxu0 0.0
          %315 = vmatprep.subr.mxu0 0.0
          %316 = vmatpush1.msra.mxu0 0.0
          %317 = vmatprep.subr.mxu0 0.0
          %318 = vmatpush1.msra.mxu0 0.0
          %319 = vmatprep.subr.mxu0 0.0
          %320 = vmatpush1.msra.mxu0 0.0
          %321 = vmatprep.subr.mxu0 0.0
          %322 = vmatpush1.msra.mxu0 0.0
          %323 = vmatprep.subr.mxu0 0.0
          %324 = vmatpush1.msra.mxu0 0.0
          %325 = vmatprep.subr.mxu0 0.0
          %326 = vmatpush1.msra.mxu0 0.0
          %327 = vmatprep.subr.mxu0 0.0
          %328 = vmatpush1.msra.mxu0 0.0
          %329 = vmatprep.subr.mxu0 0.0
          %330 = vmatpush1.msra.mxu0 0.0
          %331 = vmatprep.subr.mxu0 0.0
          %332 = vmatpush1.msra.mxu0 0.0
          %333 = vmatprep.subr.mxu0 0.0
          %334 = vmatpush1.msra.mxu0 0.0
          %335 = vmatprep.subr.mxu0 0.0
          %336 = vmatpush1.msra.mxu0 0.0
          %337 = vmatprep.subr.mxu0 0.0
          %338 = vmatpush1.msra.mxu0 0.0
          %339 = vmatprep.subr.mxu0 0.0
          %340 = vmatpush1.msra.mxu0 0.0
          %341 = vmatprep.subr.mxu0 0.0
          %342 = vmatpush1.msra.mxu0 0.0
          %343 = vmatprep.subr.mxu0 0.0
          %344 = vmatpush1.msra.mxu0 0.0
          %345 = vmatprep.subr.mxu0 0.0
          %346 = vmatpush1.msra.mxu0 0.0
          %347 = vmatprep.subr.mxu0 0.0
          %348 = vmatpush1.msra.mxu0 0.0
          %349 = vmatprep.subr.mxu0 0.0
          %350 = vmatpush1.msra.mxu0 0.0
          %351 = vmatprep.subr.mxu0 0.0
          %352 = vmatpush1.msra.mxu0 0.0
          %353 = vmatprep.subr.mxu0 0.0
          %354 = vmatpush1.msra.mxu0 0.0
          %355 = vmatprep.subr.mxu0 0.0
          %356 = vmatpush1.msra.mxu0 0.0
          %357 = vmatprep.subr.mxu0 0.0
          %358 = vmatpush1.msra.mxu0 0.0
          %359 = vmatprep.subr.mxu0 0.0
          %360 = vmatpush1.msra.mxu0 0.0
          %361 = vmatprep.subr.mxu0 0.0
          %362 = vmatpush1.msra.mxu0 0.0
          %363 = vmatprep.mubr.f32.mxu0 0.0
          %364 = vmatmul.mubr.f32.gmra.mrb[0].mxu0 %v294
          %v365 = vpop.f32.mrb[0].mxu0
          %v366 = vadd.f32 0.0, %v365
          %v367 = vpop.f32.mrb[0].mxu0
          %368 = vmatprep.mubr.f32.mxu0 0.0
          %369 = vmatmul.mubr.f32.gmra.mrb[0].mxu0 %v297
          %v370 = vpop.f32.mrb[0].mxu0
          %v371 = vadd.f32 0.0, %v370
          %v372 = vpop.f32.mrb[0].mxu0
          %373 = vdwg.mxu0
          %374 = vmatprep.subr.mxu0 0.0
          %375 = vmatpush1.msra.mxu0 %v286
          %376 = vmatprep.subr.mxu0 0.0
          %377 = vmatpush1.msra.mxu0 %v289
          %378 = vmatprep.subr.mxu0 0.0
          %379 = vmatpush1.msra.mxu0 0.0
          %380 = vmatprep.subr.mxu0 0.0
          %381 = vmatpush1.msra.mxu0 0.0
          %382 = vmatprep.subr.mxu0 0.0
          %383 = vmatpush1.msra.mxu0 0.0
          %384 = vmatprep.subr.mxu0 0.0
          %385 = vmatpush1.msra.mxu0 0.0
          %386 = vmatprep.subr.mxu0 0.0
          %387 = vmatpush1.msra.mxu0 0.0
          %388 = vmatprep.subr.mxu0 0.0
          %389 = vmatpush1.msra.mxu0 0.0
          %390 = vmatprep.subr.mxu0 0.0
          %391 = vmatpush1.msra.mxu0 0.0
          %392 = vmatprep.subr.mxu0 0.0
          %393 = vmatpush1.msra.mxu0 0.0
          %394 = vmatprep.subr.mxu0 0.0
          %395 = vmatpush1.msra.mxu0 0.0
          %396 = vmatprep.subr.mxu0 0.0
          %397 = vmatpush1.msra.mxu0 0.0
          %398 = vmatprep.subr.mxu0 0.0
          %399 = vmatpush1.msra.mxu0 0.0
          %400 = vmatprep.subr.mxu0 0.0
          %401 = vmatpush1.msra.mxu0 0.0
          %402 = vmatprep.subr.mxu0 0.0
          %403 = vmatpush1.msra.mxu0 0.0
          %404 = vmatprep.subr.mxu0 0.0
          %405 = vmatpush1.msra.mxu0 0.0
          %406 = vmatprep.subr.mxu0 0.0
          %407 = vmatpush1.msra.mxu0 0.0
          %408 = vmatprep.subr.mxu0 0.0
          %409 = vmatpush1.msra.mxu0 0.0
          %410 = vmatprep.subr.mxu0 0.0
          %411 = vmatpush1.msra.mxu0 0.0
          %412 = vmatprep.subr.mxu0 0.0
          %413 = vmatpush1.msra.mxu0 0.0
          %414 = vmatprep.subr.mxu0 0.0
          %415 = vmatpush1.msra.mxu0 0.0
          %416 = vmatprep.subr.mxu0 0.0
          %417 = vmatpush1.msra.mxu0 0.0
          %418 = vmatprep.subr.mxu0 0.0
          %419 = vmatpush1.msra.mxu0 0.0
          %420 = vmatprep.subr.mxu0 0.0
          %421 = vmatpush1.msra.mxu0 0.0
          %422 = vmatprep.subr.mxu0 0.0
          %423 = vmatpush1.msra.mxu0 0.0
          %424 = vmatprep.subr.mxu0 0.0
          %425 = vmatpush1.msra.mxu0 0.0
          %426 = vmatprep.subr.mxu0 0.0
          %427 = vmatpush1.msra.mxu0 0.0
          %428 = vmatprep.subr.mxu0 0.0
          %429 = vmatpush1.msra.mxu0 0.0
          %430 = vmatprep.subr.mxu0 0.0
          %431 = vmatpush1.msra.mxu0 0.0
          %432 = vmatprep.subr.mxu0 0.0
          %433 = vmatpush1.msra.mxu0 0.0
          %434 = vmatprep.subr.mxu0 0.0
          %435 = vmatpush1.msra.mxu0 0.0
          %436 = vmatprep.subr.mxu0 0.0
          %437 = vmatpush1.msra.mxu0 0.0
          %438 = vmatprep.mubr.f32.mxu0 0.0
          %439 = vmatmul.mubr.f32.gmra.mrb[0].mxu0 %v294
          %v440 = vpop.f32.mrb[0].mxu0
          %v441 = vadd.f32 0.0, %v440
          %v442 = vpop.f32.mrb[0].mxu0
          %443 = vmatprep.mubr.f32.mxu0 0.0
          %444 = vmatmul.mubr.f32.gmra.mrb[0].mxu0 %v297
          %v445 = vpop.f32.mrb[0].mxu0
          %v446 = vadd.f32 0.0, %v445
          %v447 = vpop.f32.mrb[0].mxu0
          %448 = vdwg.mxu0
          %v449 = vmul.f32 %v366, %v366
          %v450 = vmul.f32 %v371, %v371
          %v451 = vsub.f32 %v441, %v449
          %v452 = vsub.f32 %v446, %v450
          %v453 = vadd.f32 %v451, 1e-06
          %v454 = vadd.f32 %v452, 1e-06
          %v455 = vrsqrt.pop %v453
          %v456 = vrsqrt.pop %v454
          %458 = vset.pattern.permute.xlu0 0
          %459 = vperm.xlu0 %458, %v366
          %v460 = vpop.permute.xlu0 %459
          %463 = vset.pattern.permute.xlu0 0
          %464 = vperm.xlu0 %463, %v371
          %v465 = vpop.permute.xlu0 %464
          %v467 = vsub.f32 %v270, %v460
          %v468 = vsub.f32 %v271, %v460
          %v469 = vsub.f32 %v272, %v465
          %v470 = vsub.f32 %v273, %v465
          %472 = vset.pattern.permute.xlu0 0
          %473 = vperm.xlu0 %472, %v455
          %v474 = vpop.permute.xlu0 %473
          %477 = vset.pattern.permute.xlu0 0
          %478 = vperm.xlu0 %477, %v456
          %v479 = vpop.permute.xlu0 %478
          %v481 = vmul.f32 %v467, %v474
          %v482 = vmul.f32 %v468, %v474
          %v483 = vmul.f32 %v469, %v479
          %v484 = vmul.f32 %v470, %v479
          %v485 = vpack.c.bf16 %v483, %v481
          %v486 = vpack.c.bf16 %v484, %v482
          %v487 = vld [vmem:[%s2] sm:$0xf]
          %v488 = vld [vmem:[%s2 + $0x4] sm:$0xf]
          %v489 = vld [vmem:[%s2 + $0x8] sm:$0xf]
          %v490 = vld [vmem:[%s2 + $0xc] sm:$0xf]
          %v491 = vld [vmem:[%s2 + $0x10] sm:$0xf]
          %v492 = vld [vmem:[%s2 + $0x14] sm:$0xf]
          %v493 = vld [vmem:[%s3] sm:$0xff]
          %v494 = vld [vmem:[%s3 + $0x8] sm:$0xff]
          %v495 = vld [vmem:[%s3 + $0x10] sm:$0xff]
          %v496 = vld [vmem:[%s3 + $0x18] sm:$0xff]
          %v497 = vld [vmem:[%s3 + $0x20] sm:$0xff]
          %v498 = vld [vmem:[%s3 + $0x28] sm:$0xff]
          %500 = vset.pattern.permute.xlu0 0
          %501 = vperm.xlu0 %500, %v493
          %v502 = vpop.permute.xlu0 %501
          %505 = vset.pattern.permute.xlu0 0
          %506 = vperm.xlu0 %505, %v494
          %v507 = vpop.permute.xlu0 %506
          %510 = vset.pattern.permute.xlu0 0
          %511 = vperm.xlu0 %510, %v495
          %v512 = vpop.permute.xlu0 %511
          %515 = vset.pattern.permute.xlu0 0
          %516 = vperm.xlu0 %515, %v496
          %v517 = vpop.permute.xlu0 %516
          %520 = vset.pattern.permute.xlu0 0
          %521 = vperm.xlu0 %520, %v497
          %v522 = vpop.permute.xlu0 %521
          %525 = vset.pattern.permute.xlu0 0
          %526 = vperm.xlu0 %525, %v498
          %v527 = vpop.permute.xlu0 %526
          %v535 = vunpack.c.l.b16 %v487
          %v536 = vunpack.c.l.b16 %v488
          %v537 = vunpack.c.l.b16 %v489
          %v538 = vunpack.c.l.b16 %v490
          %v539 = vunpack.c.l.b16 %v491
          %v540 = vunpack.c.l.b16 %v492
          %v541 = vpack.c.b16 %v536, %v535
          %v542 = vpack.c.b16 %v538, %v537
          %v543 = vpack.c.b16 %v540, %v539
          %v545 = vsel %vm292, %v541, 0
          %v548 = vsel %vm292, %v542, 0
          %v551 = vsel %vm292, %v543, 0
          %553 = vmatprep.subr.bf16.mxu0 %v486
          %554 = vmatpush1.bf16.msra.mxu0 %v485
          %555 = vmatprep.subr.bf16.mxu0 0
          %556 = vmatpush1.bf16.msra.mxu0 0
          %557 = vmatprep.subr.bf16.mxu0 0
          %558 = vmatpush1.bf16.msra.mxu0 0
          %559 = vmatprep.subr.bf16.mxu0 0
          %560 = vmatpush1.bf16.msra.mxu0 0
          %561 = vmatprep.subr.bf16.mxu0 0
          %562 = vmatpush1.bf16.msra.mxu0 0
          %563 = vmatprep.subr.bf16.mxu0 0
          %564 = vmatpush1.bf16.msra.mxu0 0
          %565 = vmatprep.subr.bf16.mxu0 0
          %566 = vmatpush1.bf16.msra.mxu0 0
          %567 = vmatprep.subr.bf16.mxu0 0
          %568 = vmatpush1.bf16.msra.mxu0 0
          %569 = vmatprep.subr.bf16.mxu0 0
          %570 = vmatpush1.bf16.msra.mxu0 0
          %571 = vmatprep.subr.bf16.mxu0 0
          %572 = vmatpush1.bf16.msra.mxu0 0
          %573 = vmatprep.subr.bf16.mxu0 0
          %574 = vmatpush1.bf16.msra.mxu0 0
          %575 = vmatprep.subr.bf16.mxu0 0
          %576 = vmatpush1.bf16.msra.mxu0 0
          %577 = vmatprep.subr.bf16.mxu0 0
          %578 = vmatpush1.bf16.msra.mxu0 0
          %579 = vmatprep.subr.bf16.mxu0 0
          %580 = vmatpush1.bf16.msra.mxu0 0
          %581 = vmatprep.subr.bf16.mxu0 0
          %582 = vmatpush1.bf16.msra.mxu0 0
          %583 = vmatprep.subr.bf16.mxu0 0
          %584 = vmatpush1.bf16.msra.mxu0 0
          %585 = vmatprep.mubr.bf16.mxu0 0
          %586 = vmatmul.mubr.bf16.gmra.mrb[0].mxu0 %v545
          %v587 = vpop.f32.mrb[0].mxu0
          %v588 = vadd.f32 %v502, %v587
          %v589 = vpop.f32.mrb[0].mxu0
          %v590 = vadd.f32 %v502, %v589
          %v591 = vpop.f32.mrb[0].mxu0
          %v592 = vadd.f32 %v507, %v591
          %v593 = vpop.f32.mrb[0].mxu0
          %v594 = vadd.f32 %v507, %v593
          %595 = vmatprep.mubr.bf16.mxu0 0
          %596 = vmatmul.mubr.bf16.gmra.mrb[0].mxu0 %v548
          %v597 = vpop.f32.mrb[0].mxu0
          %v598 = vadd.f32 %v512, %v597
          %v599 = vpop.f32.mrb[0].mxu0
          %v600 = vadd.f32 %v512, %v599
          %v601 = vpop.f32.mrb[0].mxu0
          %v602 = vadd.f32 %v517, %v601
          %v603 = vpop.f32.mrb[0].mxu0
          %v604 = vadd.f32 %v517, %v603
          %605 = vmatprep.mubr.bf16.mxu0 0
          %606 = vmatmul.mubr.bf16.gmra.mrb[0].mxu0 %v551
          %v607 = vpop.f32.mrb[0].mxu0
          %v608 = vadd.f32 %v522, %v607
          %v609 = vpop.f32.mrb[0].mxu0
          %v610 = vadd.f32 %v522, %v609
          %v611 = vpop.f32.mrb[0].mxu0
          %v612 = vadd.f32 %v527, %v611
          %v613 = vpop.f32.mrb[0].mxu0
          %v614 = vadd.f32 %v527, %v613
          %615 = vdwg.mxu0
          %v616 = vpack.c.bf16 %v592, %v588
          %v617 = vpack.c.bf16 %v594, %v590
          %618 = vst [vmem:[#allocation2] sm:$0xff] %v616
          %619 = vst [vmem:[#allocation2 + $0x8] sm:$0xff] %v617
          %v620 = vpack.c.bf16 %v602, %v598
          %v621 = vpack.c.bf16 %v604, %v600
          %622 = vst [vmem:[#allocation3] sm:$0xff] %v620
          %623 = vst [vmem:[#allocation3 + $0x8] sm:$0xff] %v621
          %v624 = vpack.c.bf16 %v612, %v608
          %v625 = vpack.c.bf16 %v614, %v610
          %626 = vst [vmem:[#allocation4] sm:$0xff] %v624
          %627 = vst [vmem:[#allocation4 + $0x8] sm:$0xff] %v625
        $region48: #{tpu_custom_call.1} parent=43 // pred_fallthru
          _
        %s628 = smul.u32 %s25, 256
        %s629 = sshra.s32 %s628, 7
        %s630 = sand.u32 %s628, 127
        %s631 = smul.addr %s629, 8
        %s632 = scalar_lea.vmem [#allocation2], %s631
        %v633 = vld [vmem:[%s632] sm:$0xff]
        %v634 = vld [vmem:[%s632 + $0x8] sm:$0xff]
        %v635 = vld [vmem:[#allocation3] sm:$0xff]
        %v636 = vld [vmem:[#allocation3 + $0x8] sm:$0xff]
        %637 = vxpose.xlu0.c.b16.start [1/8] %v633, 128
        %638 = vxpose.xlu0.c.b16.cont [2/8] 0, 128
        %639 = vxpose.xlu0.c.b16.cont [3/8] 0, 128
        %640 = vxpose.xlu0.c.b16.cont [4/8] 0, 128
        %641 = vxpose.xlu0.c.b16.cont [5/8] 0, 128
        %642 = vxpose.xlu0.c.b16.cont [6/8] 0, 128
        %643 = vxpose.xlu0.c.b16.cont [7/8] 0, 128
        %644 = vxpose.xlu0.c.b16.end [8/8] 0, 128
        %v645 = vpop.trf.xlu0
        %v646 = vpop.trf.xlu0
        %v647 = vpop.trf.xlu0
        %v648 = vpop.trf.xlu0
        %v649 = vpop.trf.xlu0
        %v650 = vpop.trf.xlu0
        %v651 = vpop.trf.xlu0
        %v652 = vpop.trf.xlu0
        %653 = vxpose.xlu0.c.b16.start [1/8] %v634, 128
        %654 = vxpose.xlu0.c.b16.cont [2/8] 0, 128
        %655 = vxpose.xlu0.c.b16.cont [3/8] 0, 128
        %656 = vxpose.xlu0.c.b16.cont [4/8] 0, 128
        %657 = vxpose.xlu0.c.b16.cont [5/8] 0, 128
        %658 = vxpose.xlu0.c.b16.cont [6/8] 0, 128
        %659 = vxpose.xlu0.c.b16.cont [7/8] 0, 128
        %660 = vxpose.xlu0.c.b16.end [8/8] 0, 128
        %v661 = vpop.trf.xlu0
        %v662 = vpop.trf.xlu0
        %v663 = vpop.trf.xlu0
        %v664 = vpop.trf.xlu0
        %v665 = vpop.trf.xlu0
        %v666 = vpop.trf.xlu0
        %v667 = vpop.trf.xlu0
        %v668 = vpop.trf.xlu0
        %vm669 = vcmask 130048
        %v671 = vsel %vm669, %v645, 0
        %v674 = vsel %vm669, %v646, 0
        %v677 = vsel %vm669, %v647, 0
        %v680 = vsel %vm669, %v648, 0
        %v683 = vsel %vm669, %v649, 0
        %v686 = vsel %vm669, %v650, 0
        %v689 = vsel %vm669, %v651, 0
        %v692 = vsel %vm669, %v652, 0
        %v695 = vsel %vm669, %v661, 0
        %v698 = vsel %vm669, %v662, 0
        %v701 = vsel %vm669, %v663, 0
        %v704 = vsel %vm669, %v664, 0
        %v707 = vsel %vm669, %v665, 0
        %v710 = vsel %vm669, %v666, 0
        %v713 = vsel %vm669, %v667, 0
        %v716 = vsel %vm669, %v668, 0
        %718 = vmatprep.subr.bf16.mxu0 %v636
        %719 = vmatpush1.bf16.msra.mxu0 %v635
        %720 = vmatprep.subr.bf16.mxu0 0
        %721 = vmatpush1.bf16.msra.mxu0 0
        %722 = vmatprep.subr.bf16.mxu0 0
        %723 = vmatpush1.bf16.msra.mxu0 0
        %724 = vmatprep.subr.bf16.mxu0 0
        %725 = vmatpush1.bf16.msra.mxu0 0
        %726 = vmatprep.subr.bf16.mxu0 0
        %727 = vmatpush1.bf16.msra.mxu0 0
        %728 = vmatprep.subr.bf16.mxu0 0
        %729 = vmatpush1.bf16.msra.mxu0 0
        %730 = vmatprep.subr.bf16.mxu0 0
        %731 = vmatpush1.bf16.msra.mxu0 0
        %732 = vmatprep.subr.bf16.mxu0 0
        %733 = vmatpush1.bf16.msra.mxu0 0
        %734 = vmatprep.subr.bf16.mxu0 0
        %735 = vmatpush1.bf16.msra.mxu0 0
        %736 = vmatprep.subr.bf16.mxu0 0
        %737 = vmatpush1.bf16.msra.mxu0 0
        %738 = vmatprep.subr.bf16.mxu0 0
        %739 = vmatpush1.bf16.msra.mxu0 0
        %740 = vmatprep.subr.bf16.mxu0 0
        %741 = vmatpush1.bf16.msra.mxu0 0
        %742 = vmatprep.subr.bf16.mxu0 0
        %743 = vmatpush1.bf16.msra.mxu0 0
        %744 = vmatprep.subr.bf16.mxu0 0
        %745 = vmatpush1.bf16.msra.mxu0 0
        %746 = vmatprep.subr.bf16.mxu0 0
        %747 = vmatpush1.bf16.msra.mxu0 0
        %748 = vmatprep.subr.bf16.mxu0 0
        %749 = vmatpush1.bf16.msra.mxu0 0
        %750 = vmatprep.mubr.bf16.mxu0 0
        %751 = vmatmul.mubr.bf16.gmra.mrb[0].mxu0 %v671
        %v752 = vpop.f32.mrb[0].mxu0
        %v753 = vadd.f32 0.0, %v752
        %v754 = vpop.f32.mrb[0].mxu0
        %v755 = vadd.f32 0.0, %v754
        %v756 = vpop.f32.mrb[0].mxu0
        %v757 = vadd.f32 0.0, %v756
        %v758 = vpop.f32.mrb[0].mxu0
        %v759 = vadd.f32 0.0, %v758
        %760 = vmatprep.mubr.bf16.mxu0 0
        %761 = vmatmul.mubr.bf16.gmra.mrb[0].mxu0 %v674
        %v762 = vpop.f32.mrb[0].mxu0
        %v763 = vadd.f32 0.0, %v762
        %v764 = vpop.f32.mrb[0].mxu0
        %v765 = vadd.f32 0.0, %v764
        %v766 = vpop.f32.mrb[0].mxu0
        %v767 = vadd.f32 0.0, %v766
        %v768 = vpop.f32.mrb[0].mxu0
        %v769 = vadd.f32 0.0, %v768
        %770 = vmatprep.mubr.bf16.mxu0 0
        %771 = vmatmul.mubr.bf16.gmra.mrb[0].mxu0 %v677
        %v772 = vpop.f32.mrb[0].mxu0
        %v773 = vadd.f32 0.0, %v772
        %v774 = vpop.f32.mrb[0].mxu0
        %v775 = vadd.f32 0.0, %v774
        %v776 = vpop.f32.mrb[0].mxu0
        %v777 = vadd.f32 0.0, %v776
        %v778 = vpop.f32.mrb[0].mxu0
        %v779 = vadd.f32 0.0, %v778
        %780 = vmatprep.mubr.bf16.mxu0 0
        %781 = vmatmul.mubr.bf16.gmra.mrb[0].mxu0 %v680
        %v782 = vpop.f32.mrb[0].mxu0
        %v783 = vadd.f32 0.0, %v782
        %v784 = vpop.f32.mrb[0].mxu0
        %v785 = vadd.f32 0.0, %v784
        %v786 = vpop.f32.mrb[0].mxu0
        %v787 = vadd.f32 0.0, %v786
        %v788 = vpop.f32.mrb[0].mxu0
        %v789 = vadd.f32 0.0, %v788
        %790 = vmatprep.mubr.bf16.mxu0 0
        %791 = vmatmul.mubr.bf16.gmra.mrb[0].mxu0 %v683
        %v792 = vpop.f32.mrb[0].mxu0
        %v793 = vadd.f32 0.0, %v792
        %v794 = vpop.f32.mrb[0].mxu0
        %v795 = vadd.f32 0.0, %v794
        %v796 = vpop.f32.mrb[0].mxu0
        %v797 = vadd.f32 0.0, %v796
        %v798 = vpop.f32.mrb[0].mxu0
        %v799 = vadd.f32 0.0, %v798
        %800 = vmatprep.mubr.bf16.mxu0 0
        %801 = vmatmul.mubr.bf16.gmra.mrb[0].mxu0 %v686
        %v802 = vpop.f32.mrb[0].mxu0
        %v803 = vadd.f32 0.0, %v802
        %v804 = vpop.f32.mrb[0].mxu0
        %v805 = vadd.f32 0.0, %v804
        %v806 = vpop.f32.mrb[0].mxu0
        %v807 = vadd.f32 0.0, %v806
        %v808 = vpop.f32.mrb[0].mxu0
        %v809 = vadd.f32 0.0, %v808
        %810 = vmatprep.mubr.bf16.mxu0 0
        %811 = vmatmul.mubr.bf16.gmra.mrb[0].mxu0 %v689
        %v812 = vpop.f32.mrb[0].mxu0
        %v813 = vadd.f32 0.0, %v812
        %v814 = vpop.f32.mrb[0].mxu0
        %v815 = vadd.f32 0.0, %v814
        %v816 = vpop.f32.mrb[0].mxu0
        %v817 = vadd.f32 0.0, %v816
        %v818 = vpop.f32.mrb[0].mxu0
        %v819 = vadd.f32 0.0, %v818
        %820 = vmatprep.mubr.bf16.mxu0 0
        %821 = vmatmul.mubr.bf16.gmra.mrb[0].mxu0 %v692
        %v822 = vpop.f32.mrb[0].mxu0
        %v823 = vadd.f32 0.0, %v822
        %v824 = vpop.f32.mrb[0].mxu0
        %v825 = vadd.f32 0.0, %v824
        %v826 = vpop.f32.mrb[0].mxu0
        %v827 = vadd.f32 0.0, %v826
        %v828 = vpop.f32.mrb[0].mxu0
        %v829 = vadd.f32 0.0, %v828
        %830 = vmatprep.mubr.bf16.mxu0 0
        %831 = vmatmul.mubr.bf16.gmra.mrb[0].mxu0 %v695
        %v832 = vpop.f32.mrb[0].mxu0
        %v833 = vadd.f32 0.0, %v832
        %v834 = vpop.f32.mrb[0].mxu0
        %v835 = vadd.f32 0.0, %v834
        %v836 = vpop.f32.mrb[0].mxu0
        %v837 = vadd.f32 0.0, %v836
        %v838 = vpop.f32.mrb[0].mxu0
        %v839 = vadd.f32 0.0, %v838
        %840 = vmatprep.mubr.bf16.mxu0 0
        %841 = vmatmul.mubr.bf16.gmra.mrb[0].mxu0 %v698
        %v842 = vpop.f32.mrb[0].mxu0
        %v843 = vadd.f32 0.0, %v842
        %v844 = vpop.f32.mrb[0].mxu0
        %v845 = vadd.f32 0.0, %v844
        %v846 = vpop.f32.mrb[0].mxu0
        %v847 = vadd.f32 0.0, %v846
        %v848 = vpop.f32.mrb[0].mxu0
        %v849 = vadd.f32 0.0, %v848
        %850 = vmatprep.mubr.bf16.mxu0 0
        %851 = vmatmul.mubr.bf16.gmra.mrb[0].mxu0 %v701
        %v852 = vpop.f32.mrb[0].mxu0
        %v853 = vadd.f32 0.0, %v852
        %v854 = vpop.f32.mrb[0].mxu0
        %v855 = vadd.f32 0.0, %v854
        %v856 = vpop.f32.mrb[0].mxu0
        %v857 = vadd.f32 0.0, %v856
        %v858 = vpop.f32.mrb[0].mxu0
        %v859 = vadd.f32 0.0, %v858
        %860 = vmatprep.mubr.bf16.mxu0 0
        %861 = vmatmul.mubr.bf16.gmra.mrb[0].mxu0 %v704
        %v862 = vpop.f32.mrb[0].mxu0
        %v863 = vadd.f32 0.0, %v862
        %v864 = vpop.f32.mrb[0].mxu0
        %v865 = vadd.f32 0.0, %v864
        %v866 = vpop.f32.mrb[0].mxu0
        %v867 = vadd.f32 0.0, %v866
        %v868 = vpop.f32.mrb[0].mxu0
        %v869 = vadd.f32 0.0, %v868
        %870 = vmatprep.mubr.bf16.mxu0 0
        %871 = vmatmul.mubr.bf16.gmra.mrb[0].mxu0 %v707
        %v872 = vpop.f32.mrb[0].mxu0
        %v873 = vadd.f32 0.0, %v872
        %v874 = vpop.f32.mrb[0].mxu0
        %v875 = vadd.f32 0.0, %v874
        %v876 = vpop.f32.mrb[0].mxu0
        %v877 = vadd.f32 0.0, %v876
        %v878 = vpop.f32.mrb[0].mxu0
        %v879 = vadd.f32 0.0, %v878
        %880 = vmatprep.mubr.bf16.mxu0 0
        %881 = vmatmul.mubr.bf16.gmra.mrb[0].mxu0 %v710
        %v882 = vpop.f32.mrb[0].mxu0
        %v883 = vadd.f32 0.0, %v882
        %v884 = vpop.f32.mrb[0].mxu0
        %v885 = vadd.f32 0.0, %v884
        %v886 = vpop.f32.mrb[0].mxu0
        %v887 = vadd.f32 0.0, %v886
        %v888 = vpop.f32.mrb[0].mxu0
        %v889 = vadd.f32 0.0, %v888
        %890 = vmatprep.mubr.bf16.mxu0 0
        %891 = vmatmul.mubr.bf16.gmra.mrb[0].mxu0 %v713
        %v892 = vpop.f32.mrb[0].mxu0
        %v893 = vadd.f32 0.0, %v892
        %v894 = vpop.f32.mrb[0].mxu0
        %v895 = vadd.f32 0.0, %v894
        %v896 = vpop.f32.mrb[0].mxu0
        %v897 = vadd.f32 0.0, %v896
        %v898 = vpop.f32.mrb[0].mxu0
        %v899 = vadd.f32 0.0, %v898
        %900 = vmatprep.mubr.bf16.mxu0 0
        %901 = vmatmul.mubr.bf16.gmra.mrb[0].mxu0 %v716
        %v902 = vpop.f32.mrb[0].mxu0
        %v903 = vadd.f32 0.0, %v902
        %v904 = vpop.f32.mrb[0].mxu0
        %v905 = vadd.f32 0.0, %v904
        %v906 = vpop.f32.mrb[0].mxu0
        %v907 = vadd.f32 0.0, %v906
        %v908 = vpop.f32.mrb[0].mxu0
        %v909 = vadd.f32 0.0, %v908
        %910 = vdwg.mxu0
        %v911 = vmax.f32 %v753, %v755
        %912 = vmax.xlane.f32.xlu0 %v911
        %v913 = vpop.xlane.xlu0 %912
        %v914 = vmax.f32 %v757, %v759
        %915 = vmax.xlane.f32.xlu0 %v914
        %v916 = vpop.xlane.xlu0 %915
        %v917 = vmax.f32 %v763, %v765
        %918 = vmax.xlane.f32.xlu0 %v917
        %v919 = vpop.xlane.xlu0 %918
        %v920 = vmax.f32 %v767, %v769
        %921 = vmax.xlane.f32.xlu0 %v920
        %v922 = vpop.xlane.xlu0 %921
        %v923 = vmax.f32 %v773, %v775
        %924 = vmax.xlane.f32.xlu0 %v923
        %v925 = vpop.xlane.xlu0 %924
        %v926 = vmax.f32 %v777, %v779
        %927 = vmax.xlane.f32.xlu0 %v926
        %v928 = vpop.xlane.xlu0 %927
        %v929 = vmax.f32 %v783, %v785
        %930 = vmax.xlane.f32.xlu0 %v929
        %v931 = vpop.xlane.xlu0 %930
        %v932 = vmax.f32 %v787, %v789
        %933 = vmax.xlane.f32.xlu0 %v932
        %v934 = vpop.xlane.xlu0 %933
        %v935 = vmax.f32 %v793, %v795
        %936 = vmax.xlane.f32.xlu0 %v935
        %v937 = vpop.xlane.xlu0 %936
        %v938 = vmax.f32 %v797, %v799
        %939 = vmax.xlane.f32.xlu0 %v938
        %v940 = vpop.xlane.xlu0 %939
        %v941 = vmax.f32 %v803, %v805
        %942 = vmax.xlane.f32.xlu0 %v941
        %v943 = vpop.xlane.xlu0 %942
        %v944 = vmax.f32 %v807, %v809
        %945 = vmax.xlane.f32.xlu0 %v944
        %v946 = vpop.xlane.xlu0 %945
        %v947 = vmax.f32 %v813, %v815
        %948 = vmax.xlane.f32.xlu0 %v947
        %v949 = vpop.xlane.xlu0 %948
        %v950 = vmax.f32 %v817, %v819
        %951 = vmax.xlane.f32.xlu0 %v950
        %v952 = vpop.xlane.xlu0 %951
        %v953 = vmax.f32 %v823, %v825
        %954 = vmax.xlane.f32.xlu0 %v953
        %v955 = vpop.xlane.xlu0 %954
        %v956 = vmax.f32 %v827, %v829
        %957 = vmax.xlane.f32.xlu0 %v956
        %v958 = vpop.xlane.xlu0 %957
        %v959 = vmax.f32 %v833, %v835
        %960 = vmax.xlane.f32.xlu0 %v959
        %v961 = vpop.xlane.xlu0 %960
        %v962 = vmax.f32 %v837, %v839
        %963 = vmax.xlane.f32.xlu0 %v962
        %v964 = vpop.xlane.xlu0 %963
        %v965 = vmax.f32 %v843, %v845
        %966 = vmax.xlane.f32.xlu0 %v965
        %v967 = vpop.xlane.xlu0 %966
        %v968 = vmax.f32 %v847, %v849
        %969 = vmax.xlane.f32.xlu0 %v968
        %v970 = vpop.xlane.xlu0 %969
        %v971 = vmax.f32 %v853, %v855
        %972 = vmax.xlane.f32.xlu0 %v971
        %v973 = vpop.xlane.xlu0 %972
        %v974 = vmax.f32 %v857, %v859
        %975 = vmax.xlane.f32.xlu0 %v974
        %v976 = vpop.xlane.xlu0 %975
        %v977 = vmax.f32 %v863, %v865
        %978 = vmax.xlane.f32.xlu0 %v977
        %v979 = vpop.xlane.xlu0 %978
        %v980 = vmax.f32 %v867, %v869
        %981 = vmax.xlane.f32.xlu0 %v980
        %v982 = vpop.xlane.xlu0 %981
        %v983 = vmax.f32 %v873, %v875
        %984 = vmax.xlane.f32.xlu0 %v983
        %v985 = vpop.xlane.xlu0 %984
        %v986 = vmax.f32 %v877, %v879
        %987 = vmax.xlane.f32.xlu0 %v986
        %v988 = vpop.xlane.xlu0 %987
        %v989 = vmax.f32 %v883, %v885
        %990 = vmax.xlane.f32.xlu0 %v989
        %v991 = vpop.xlane.xlu0 %990
        %v992 = vmax.f32 %v887, %v889
        %993 = vmax.xlane.f32.xlu0 %v992
        %v994 = vpop.xlane.xlu0 %993
        %v995 = vmax.f32 %v893, %v895
        %996 = vmax.xlane.f32.xlu0 %v995
        %v997 = vpop.xlane.xlu0 %996
        %v998 = vmax.f32 %v897, %v899
        %999 = vmax.xlane.f32.xlu0 %v998
        %v1000 = vpop.xlane.xlu0 %999
        %v1001 = vmax.f32 %v903, %v905
        %1002 = vmax.xlane.f32.xlu0 %v1001
        %v1003 = vpop.xlane.xlu0 %1002
        %v1004 = vmax.f32 %v907, %v909
        %1005 = vmax.xlane.f32.xlu0 %v1004
        %v1006 = vpop.xlane.xlu0 %1005
        %v1007 = vsub.f32 %v753, %v913
        %v1008 = vsub.f32 %v755, %v913
        %v1009 = vsub.f32 %v757, %v916
        %v1010 = vsub.f32 %v759, %v916
        %v1011 = vsub.f32 %v763, %v919
        %v1012 = vsub.f32 %v765, %v919
        %v1013 = vsub.f32 %v767, %v922
        %v1014 = vsub.f32 %v769, %v922
        %v1015 = vsub.f32 %v773, %v925
        %v1016 = vsub.f32 %v775, %v925
        %v1017 = vsub.f32 %v777, %v928
        %v1018 = vsub.f32 %v779, %v928
        %v1019 = vsub.f32 %v783, %v931
        %v1020 = vsub.f32 %v785, %v931
        %v1021 = vsub.f32 %v787, %v934
        %v1022 = vsub.f32 %v789, %v934
        %v1023 = vsub.f32 %v793, %v937
        %v1024 = vsub.f32 %v795, %v937
        %v1025 = vsub.f32 %v797, %v940
        %v1026 = vsub.f32 %v799, %v940
        %v1027 = vsub.f32 %v803, %v943
        %v1028 = vsub.f32 %v805, %v943
        %v1029 = vsub.f32 %v807, %v946
        %v1030 = vsub.f32 %v809, %v946
        %v1031 = vsub.f32 %v813, %v949
        %v1032 = vsub.f32 %v815, %v949
        %v1033 = vsub.f32 %v817, %v952
        %v1034 = vsub.f32 %v819, %v952
        %v1035 = vsub.f32 %v823, %v955
        %v1036 = vsub.f32 %v825, %v955
        %v1037 = vsub.f32 %v827, %v958
        %v1038 = vsub.f32 %v829, %v958
        %v1039 = vsub.f32 %v833, %v961
        %v1040 = vsub.f32 %v835, %v961
        %v1041 = vsub.f32 %v837, %v964
        %v1042 = vsub.f32 %v839, %v964
        %v1043 = vsub.f32 %v843, %v967
        %v1044 = vsub.f32 %v845, %v967
        %v1045 = vsub.f32 %v847, %v970
        %v1046 = vsub.f32 %v849, %v970
        %v1047 = vsub.f32 %v853, %v973
        %v1048 = vsub.f32 %v855, %v973
        %v1049 = vsub.f32 %v857, %v976
        %v1050 = vsub.f32 %v859, %v976
        %v1051 = vsub.f32 %v863, %v979
        %v1052 = vsub.f32 %v865, %v979
        %v1053 = vsub.f32 %v867, %v982
        %v1054 = vsub.f32 %v869, %v982
        %v1055 = vsub.f32 %v873, %v985
        %v1056 = vsub.f32 %v875, %v985
        %v1057 = vsub.f32 %v877, %v988
        %v1058 = vsub.f32 %v879, %v988
        %v1059 = vsub.f32 %v883, %v991
        %v1060 = vsub.f32 %v885, %v991
        %v1061 = vsub.f32 %v887, %v994
        %v1062 = vsub.f32 %v889, %v994
        %v1063 = vsub.f32 %v893, %v997
        %v1064 = vsub.f32 %v895, %v997
        %v1065 = vsub.f32 %v897, %v1000
        %v1066 = vsub.f32 %v899, %v1000
        %v1067 = vsub.f32 %v903, %v1003
        %v1068 = vsub.f32 %v905, %v1003
        %v1069 = vsub.f32 %v907, %v1006
        %v1070 = vsub.f32 %v909, %v1006
        %v1071 = vmul.f32 %v1007, 1.442695
        %v1072 = vpow.pop %v1071
        %v1073 = vmul.f32 %v1008, 1.442695
        %v1074 = vpow.pop %v1073
        %v1075 = vmul.f32 %v1009, 1.442695
        %v1076 = vpow.pop %v1075
        %v1077 = vmul.f32 %v1010, 1.442695
        %v1078 = vpow.pop %v1077
        %v1079 = vmul.f32 %v1011, 1.442695
        %v1080 = vpow.pop %v1079
        %v1081 = vmul.f32 %v1012, 1.442695
        %v1082 = vpow.pop %v1081
        %v1083 = vmul.f32 %v1013, 1.442695
        %v1084 = vpow.pop %v1083
        %v1085 = vmul.f32 %v1014, 1.442695
        %v1086 = vpow.pop %v1085
        %v1087 = vmul.f32 %v1015, 1.442695
        %v1088 = vpow.pop %v1087
        %v1089 = vmul.f32 %v1016, 1.442695
        %v1090 = vpow.pop %v1089
        %v1091 = vmul.f32 %v1017, 1.442695
        %v1092 = vpow.pop %v1091
        %v1093 = vmul.f32 %v1018, 1.442695
        %v1094 = vpow.pop %v1093
        %v1095 = vmul.f32 %v1019, 1.442695
        %v1096 = vpow.pop %v1095
        %v1097 = vmul.f32 %v1020, 1.442695
        %v1098 = vpow.pop %v1097
        %v1099 = vmul.f32 %v1021, 1.442695
        %v1100 = vpow.pop %v1099
        %v1101 = vmul.f32 %v1022, 1.442695
        %v1102 = vpow.pop %v1101
        %v1103 = vmul.f32 %v1023, 1.442695
        %v1104 = vpow.pop %v1103
        %v1105 = vmul.f32 %v1024, 1.442695
        %v1106 = vpow.pop %v1105
        %v1107 = vmul.f32 %v1025, 1.442695
        %v1108 = vpow.pop %v1107
        %v1109 = vmul.f32 %v1026, 1.442695
        %v1110 = vpow.pop %v1109
        %v1111 = vmul.f32 %v1027, 1.442695
        %v1112 = vpow.pop %v1111
        %v1113 = vmul.f32 %v1028, 1.442695
        %v1114 = vpow.pop %v1113
        %v1115 = vmul.f32 %v1029, 1.442695
        %v1116 = vpow.pop %v1115
        %v1117 = vmul.f32 %v1030, 1.442695
        %v1118 = vpow.pop %v1117
        %v1119 = vmul.f32 %v1031, 1.442695
        %v1120 = vpow.pop %v1119
        %v1121 = vmul.f32 %v1032, 1.442695
        %v1122 = vpow.pop %v1121
        %v1123 = vmul.f32 %v1033, 1.442695
        %v1124 = vpow.pop %v1123
        %v1125 = vmul.f32 %v1034, 1.442695
        %v1126 = vpow.pop %v1125
        %v1127 = vmul.f32 %v1035, 1.442695
        %v1128 = vpow.pop %v1127
        %v1129 = vmul.f32 %v1036, 1.442695
        %v1130 = vpow.pop %v1129
        %v1131 = vmul.f32 %v1037, 1.442695
        %v1132 = vpow.pop %v1131
        %v1133 = vmul.f32 %v1038, 1.442695
        %v1134 = vpow.pop %v1133
        %v1135 = vmul.f32 %v1039, 1.442695
        %v1136 = vpow.pop %v1135
        %v1137 = vmul.f32 %v1040, 1.442695
        %v1138 = vpow.pop %v1137
        %v1139 = vmul.f32 %v1041, 1.442695
        %v1140 = vpow.pop %v1139
        %v1141 = vmul.f32 %v1042, 1.442695
        %v1142 = vpow.pop %v1141
        %v1143 = vmul.f32 %v1043, 1.442695
        %v1144 = vpow.pop %v1143
        %v1145 = vmul.f32 %v1044, 1.442695
        %v1146 = vpow.pop %v1145
        %v1147 = vmul.f32 %v1045, 1.442695
        %v1148 = vpow.pop %v1147
        %v1149 = vmul.f32 %v1046, 1.442695
        %v1150 = vpow.pop %v1149
        %v1151 = vmul.f32 %v1047, 1.442695
        %v1152 = vpow.pop %v1151
        %v1153 = vmul.f32 %v1048, 1.442695
        %v1154 = vpow.pop %v1153
        %v1155 = vmul.f32 %v1049, 1.442695
        %v1156 = vpow.pop %v1155
        %v1157 = vmul.f32 %v1050, 1.442695
        %v1158 = vpow.pop %v1157
        %v1159 = vmul.f32 %v1051, 1.442695
        %v1160 = vpow.pop %v1159
        %v1161 = vmul.f32 %v1052, 1.442695
        %v1162 = vpow.pop %v1161
        %v1163 = vmul.f32 %v1053, 1.442695
        %v1164 = vpow.pop %v1163
        %v1165 = vmul.f32 %v1054, 1.442695
        %v1166 = vpow.pop %v1165
        %v1167 = vmul.f32 %v1055, 1.442695
        %v1168 = vpow.pop %v1167
        %v1169 = vmul.f32 %v1056, 1.442695
        %v1170 = vpow.pop %v1169
        %v1171 = vmul.f32 %v1057, 1.442695
        %v1172 = vpow.pop %v1171
        %v1173 = vmul.f32 %v1058, 1.442695
        %v1174 = vpow.pop %v1173
        %v1175 = vmul.f32 %v1059, 1.442695
        %v1176 = vpow.pop %v1175
        %v1177 = vmul.f32 %v1060, 1.442695
        %v1178 = vpow.pop %v1177
        %v1179 = vmul.f32 %v1061, 1.442695
        %v1180 = vpow.pop %v1179
        %v1181 = vmul.f32 %v1062, 1.442695
        %v1182 = vpow.pop %v1181
        %v1183 = vmul.f32 %v1063, 1.442695
        %v1184 = vpow.pop %v1183
        %v1185 = vmul.f32 %v1064, 1.442695
        %v1186 = vpow.pop %v1185
        %v1187 = vmul.f32 %v1065, 1.442695
        %v1188 = vpow.pop %v1187
        %v1189 = vmul.f32 %v1066, 1.442695
        %v1190 = vpow.pop %v1189
        %v1191 = vmul.f32 %v1067, 1.442695
        %v1192 = vpow.pop %v1191
        %v1193 = vmul.f32 %v1068, 1.442695
        %v1194 = vpow.pop %v1193
        %v1195 = vmul.f32 %v1069, 1.442695
        %v1196 = vpow.pop %v1195
        %v1197 = vmul.f32 %v1070, 1.442695
        %v1198 = vpow.pop %v1197
        %v1199 = vadd.f32 %v1072, %v1074
        %1200 = vadd.xlane.f32.xlu0 %v1199
        %v1201 = vpop.xlane.xlu0 %1200
        %v1202 = vadd.f32 %v1076, %v1078
        %1203 = vadd.xlane.f32.xlu0 %v1202
        %v1204 = vpop.xlane.xlu0 %1203
        %v1205 = vadd.f32 %v1080, %v1082
        %1206 = vadd.xlane.f32.xlu0 %v1205
        %v1207 = vpop.xlane.xlu0 %1206
        %v1208 = vadd.f32 %v1084, %v1086
        %1209 = vadd.xlane.f32.xlu0 %v1208
        %v1210 = vpop.xlane.xlu0 %1209
        %v1211 = vadd.f32 %v1088, %v1090
        %1212 = vadd.xlane.f32.xlu0 %v1211
        %v1213 = vpop.xlane.xlu0 %1212
        %v1214 = vadd.f32 %v1092, %v1094
        %1215 = vadd.xlane.f32.xlu0 %v1214
        %v1216 = vpop.xlane.xlu0 %1215
        %v1217 = vadd.f32 %v1096, %v1098
        %1218 = vadd.xlane.f32.xlu0 %v1217
        %v1219 = vpop.xlane.xlu0 %1218
        %v1220 = vadd.f32 %v1100, %v1102
        %1221 = vadd.xlane.f32.xlu0 %v1220
        %v1222 = vpop.xlane.xlu0 %1221
        %v1223 = vadd.f32 %v1104, %v1106
        %1224 = vadd.xlane.f32.xlu0 %v1223
        %v1225 = vpop.xlane.xlu0 %1224
        %v1226 = vadd.f32 %v1108, %v1110
        %1227 = vadd.xlane.f32.xlu0 %v1226
        %v1228 = vpop.xlane.xlu0 %1227
        %v1229 = vadd.f32 %v1112, %v1114
        %1230 = vadd.xlane.f32.xlu0 %v1229
        %v1231 = vpop.xlane.xlu0 %1230
        %v1232 = vadd.f32 %v1116, %v1118
        %1233 = vadd.xlane.f32.xlu0 %v1232
        %v1234 = vpop.xlane.xlu0 %1233
        %v1235 = vadd.f32 %v1120, %v1122
        %1236 = vadd.xlane.f32.xlu0 %v1235
        %v1237 = vpop.xlane.xlu0 %1236
        %v1238 = vadd.f32 %v1124, %v1126
        %1239 = vadd.xlane.f32.xlu0 %v1238
        %v1240 = vpop.xlane.xlu0 %1239
        %v1241 = vadd.f32 %v1128, %v1130
        %1242 = vadd.xlane.f32.xlu0 %v1241
        %v1243 = vpop.xlane.xlu0 %1242
        %v1244 = vadd.f32 %v1132, %v1134
        %1245 = vadd.xlane.f32.xlu0 %v1244
        %v1246 = vpop.xlane.xlu0 %1245
        %v1247 = vadd.f32 %v1136, %v1138
        %1248 = vadd.xlane.f32.xlu0 %v1247
        %v1249 = vpop.xlane.xlu0 %1248
        %v1250 = vadd.f32 %v1140, %v1142
        %1251 = vadd.xlane.f32.xlu0 %v1250
        %v1252 = vpop.xlane.xlu0 %1251
        %v1253 = vadd.f32 %v1144, %v1146
        %1254 = vadd.xlane.f32.xlu0 %v1253
        %v1255 = vpop.xlane.xlu0 %1254
        %v1256 = vadd.f32 %v1148, %v1150
        %1257 = vadd.xlane.f32.xlu0 %v1256
        %v1258 = vpop.xlane.xlu0 %1257
        %v1259 = vadd.f32 %v1152, %v1154
        %1260 = vadd.xlane.f32.xlu0 %v1259
        %v1261 = vpop.xlane.xlu0 %1260
        %v1262 = vadd.f32 %v1156, %v1158
        %1263 = vadd.xlane.f32.xlu0 %v1262
        %v1264 = vpop.xlane.xlu0 %1263
        %v1265 = vadd.f32 %v1160, %v1162
        %1266 = vadd.xlane.f32.xlu0 %v1265
        %v1267 = vpop.xlane.xlu0 %1266
        %v1268 = vadd.f32 %v1164, %v1166
        %1269 = vadd.xlane.f32.xlu0 %v1268
        %v1270 = vpop.xlane.xlu0 %1269
        %v1271 = vadd.f32 %v1168, %v1170
        %1272 = vadd.xlane.f32.xlu0 %v1271
        %v1273 = vpop.xlane.xlu0 %1272
        %v1274 = vadd.f32 %v1172, %v1174
        %1275 = vadd.xlane.f32.xlu0 %v1274
        %v1276 = vpop.xlane.xlu0 %1275
        %v1277 = vadd.f32 %v1176, %v1178
        %1278 = vadd.xlane.f32.xlu0 %v1277
        %v1279 = vpop.xlane.xlu0 %1278
        %v1280 = vadd.f32 %v1180, %v1182
        %1281 = vadd.xlane.f32.xlu0 %v1280
        %v1282 = vpop.xlane.xlu0 %1281
        %v1283 = vadd.f32 %v1184, %v1186
        %1284 = vadd.xlane.f32.xlu0 %v1283
        %v1285 = vpop.xlane.xlu0 %1284
        %v1286 = vadd.f32 %v1188, %v1190
        %1287 = vadd.xlane.f32.xlu0 %v1286
        %v1288 = vpop.xlane.xlu0 %1287
        %v1289 = vadd.f32 %v1192, %v1194
        %1290 = vadd.xlane.f32.xlu0 %v1289
        %v1291 = vpop.xlane.xlu0 %1290
        %v1292 = vadd.f32 %v1196, %v1198
        %1293 = vadd.xlane.f32.xlu0 %v1292
        %v1294 = vpop.xlane.xlu0 %1293
        %v1295 = vrcp.pop %v1201
        %v1296 = vrcp.pop %v1204
        %v1297 = vrcp.pop %v1207
        %v1298 = vrcp.pop %v1210
        %v1299 = vrcp.pop %v1213
        %v1300 = vrcp.pop %v1216
        %v1301 = vrcp.pop %v1219
        %v1302 = vrcp.pop %v1222
        %v1303 = vrcp.pop %v1225
        %v1304 = vrcp.pop %v1228
        %v1305 = vrcp.pop %v1231
        %v1306 = vrcp.pop %v1234
        %v1307 = vrcp.pop %v1237
        %v1308 = vrcp.pop %v1240
        %v1309 = vrcp.pop %v1243
        %v1310 = vrcp.pop %v1246
        %v1311 = vrcp.pop %v1249
        %v1312 = vrcp.pop %v1252
        %v1313 = vrcp.pop %v1255
        %v1314 = vrcp.pop %v1258
        %v1315 = vrcp.pop %v1261
        %v1316 = vrcp.pop %v1264
        %v1317 = vrcp.pop %v1267
        %v1318 = vrcp.pop %v1270
        %v1319 = vrcp.pop %v1273
        %v1320 = vrcp.pop %v1276
        %v1321 = vrcp.pop %v1279
        %v1322 = vrcp.pop %v1282
        %v1323 = vrcp.pop %v1285
        %v1324 = vrcp.pop %v1288
        %v1325 = vrcp.pop %v1291
        %v1326 = vrcp.pop %v1294
        %v1327 = vmul.f32 %v1072, %v1295
        %v1328 = vmul.f32 %v1074, %v1295
        %v1329 = vmul.f32 %v1076, %v1296
        %v1330 = vmul.f32 %v1078, %v1296
        %v1331 = vmul.f32 %v1080, %v1297
        %v1332 = vmul.f32 %v1082, %v1297
        %v1333 = vmul.f32 %v1084, %v1298
        %v1334 = vmul.f32 %v1086, %v1298
        %v1335 = vmul.f32 %v1088, %v1299
        %v1336 = vmul.f32 %v1090, %v1299
        %v1337 = vmul.f32 %v1092, %v1300
        %v1338 = vmul.f32 %v1094, %v1300
        %v1339 = vmul.f32 %v1096, %v1301
        %v1340 = vmul.f32 %v1098, %v1301
        %v1341 = vmul.f32 %v1100, %v1302
        %v1342 = vmul.f32 %v1102, %v1302
        %v1343 = vmul.f32 %v1104, %v1303
        %v1344 = vmul.f32 %v1106, %v1303
        %v1345 = vmul.f32 %v1108, %v1304
        %v1346 = vmul.f32 %v1110, %v1304
        %v1347 = vmul.f32 %v1112, %v1305
        %v1348 = vmul.f32 %v1114, %v1305
        %v1349 = vmul.f32 %v1116, %v1306
        %v1350 = vmul.f32 %v1118, %v1306
        %v1351 = vmul.f32 %v1120, %v1307
        %v1352 = vmul.f32 %v1122, %v1307
        %v1353 = vmul.f32 %v1124, %v1308
        %v1354 = vmul.f32 %v1126, %v1308
        %v1355 = vmul.f32 %v1128, %v1309
        %v1356 = vmul.f32 %v1130, %v1309
        %v1357 = vmul.f32 %v1132, %v1310
        %v1358 = vmul.f32 %v1134, %v1310
        %v1359 = vmul.f32 %v1136, %v1311
        %v1360 = vmul.f32 %v1138, %v1311
        %v1361 = vmul.f32 %v1140, %v1312
        %v1362 = vmul.f32 %v1142, %v1312
        %v1363 = vmul.f32 %v1144, %v1313
        %v1364 = vmul.f32 %v1146, %v1313
        %v1365 = vmul.f32 %v1148, %v1314
        %v1366 = vmul.f32 %v1150, %v1314
        %v1367 = vmul.f32 %v1152, %v1315
        %v1368 = vmul.f32 %v1154, %v1315
        %v1369 = vmul.f32 %v1156, %v1316
        %v1370 = vmul.f32 %v1158, %v1316
        %v1371 = vmul.f32 %v1160, %v1317
        %v1372 = vmul.f32 %v1162, %v1317
        %v1373 = vmul.f32 %v1164, %v1318
        %v1374 = vmul.f32 %v1166, %v1318
        %v1375 = vmul.f32 %v1168, %v1319
        %v1376 = vmul.f32 %v1170, %v1319
        %v1377 = vmul.f32 %v1172, %v1320
        %v1378 = vmul.f32 %v1174, %v1320
        %v1379 = vmul.f32 %v1176, %v1321
        %v1380 = vmul.f32 %v1178, %v1321
        %v1381 = vmul.f32 %v1180, %v1322
        %v1382 = vmul.f32 %v1182, %v1322
        %v1383 = vmul.f32 %v1184, %v1323
        %v1384 = vmul.f32 %v1186, %v1323
        %v1385 = vmul.f32 %v1188, %v1324
        %v1386 = vmul.f32 %v1190, %v1324
        %v1387 = vmul.f32 %v1192, %v1325
        %v1388 = vmul.f32 %v1194, %v1325
        %v1389 = vmul.f32 %v1196, %v1326
        %v1390 = vmul.f32 %v1198, %v1326
        %v1391 = vpack.c.bf16 %v1329, %v1327
        %v1392 = vpack.c.bf16 %v1330, %v1328
        %v1393 = vpack.c.bf16 %v1333, %v1331
        %v1394 = vpack.c.bf16 %v1334, %v1332
        %v1395 = vpack.c.bf16 %v1337, %v1335
        %v1396 = vpack.c.bf16 %v1338, %v1336
        %v1397 = vpack.c.bf16 %v1341, %v1339
        %v1398 = vpack.c.bf16 %v1342, %v1340
        %v1399 = vpack.c.bf16 %v1345, %v1343
        %v1400 = vpack.c.bf16 %v1346, %v1344
        %v1401 = vpack.c.bf16 %v1349, %v1347
        %v1402 = vpack.c.bf16 %v1350, %v1348
        %v1403 = vpack.c.bf16 %v1353, %v1351
        %v1404 = vpack.c.bf16 %v1354, %v1352
        %v1405 = vpack.c.bf16 %v1357, %v1355
        %v1406 = vpack.c.bf16 %v1358, %v1356
        %v1407 = vpack.c.bf16 %v1361, %v1359
        %v1408 = vpack.c.bf16 %v1362, %v1360
        %v1409 = vpack.c.bf16 %v1365, %v1363
        %v1410 = vpack.c.bf16 %v1366, %v1364
        %v1411 = vpack.c.bf16 %v1369, %v1367
        %v1412 = vpack.c.bf16 %v1370, %v1368
        %v1413 = vpack.c.bf16 %v1373, %v1371
        %v1414 = vpack.c.bf16 %v1374, %v1372
        %v1415 = vpack.c.bf16 %v1377, %v1375
        %v1416 = vpack.c.bf16 %v1378, %v1376
        %v1417 = vpack.c.bf16 %v1381, %v1379
        %v1418 = vpack.c.bf16 %v1382, %v1380
        %v1419 = vpack.c.bf16 %v1385, %v1383
        %v1420 = vpack.c.bf16 %v1386, %v1384
        %v1421 = vpack.c.bf16 %v1389, %v1387
        %v1422 = vpack.c.bf16 %v1390, %v1388
        %v1423 = vld [vmem:[#allocation4] sm:$0xff]
        %v1424 = vld [vmem:[#allocation4 + $0x8] sm:$0xff]
        %1425 = vmatprep.subr.bf16.mxu0 %v1392
        %1426 = vmatpush1.bf16.xpose.msra.mxu0 %v1391
        %1427 = vmatprep.subr.bf16.mxu0 %v1394
        %1428 = vmatpush1.bf16.xpose.msra.mxu0 %v1393
        %1429 = vmatprep.subr.bf16.mxu0 %v1396
        %1430 = vmatpush1.bf16.xpose.msra.mxu0 %v1395
        %1431 = vmatprep.subr.bf16.mxu0 %v1398
        %1432 = vmatpush1.bf16.xpose.msra.mxu0 %v1397
        %1433 = vmatprep.subr.bf16.mxu0 %v1400
        %1434 = vmatpush1.bf16.xpose.msra.mxu0 %v1399
        %1435 = vmatprep.subr.bf16.mxu0 %v1402
        %1436 = vmatpush1.bf16.xpose.msra.mxu0 %v1401
        %1437 = vmatprep.subr.bf16.mxu0 %v1404
        %1438 = vmatpush1.bf16.xpose.msra.mxu0 %v1403
        %1439 = vmatprep.subr.bf16.mxu0 %v1406
        %1440 = vmatpush1.bf16.xpose.msra.mxu0 %v1405
        %1441 = vmatprep.subr.bf16.mxu0 %v1408
        %1442 = vmatpush1.bf16.xpose.msra.mxu0 %v1407
        %1443 = vmatprep.subr.bf16.mxu0 %v1410
        %1444 = vmatpush1.bf16.xpose.msra.mxu0 %v1409
        %1445 = vmatprep.subr.bf16.mxu0 %v1412
        %1446 = vmatpush1.bf16.xpose.msra.mxu0 %v1411
        %1447 = vmatprep.subr.bf16.mxu0 %v1414
        %1448 = vmatpush1.bf16.xpose.msra.mxu0 %v1413
        %1449 = vmatprep.subr.bf16.mxu0 %v1416
        %1450 = vmatpush1.bf16.xpose.msra.mxu0 %v1415
        %1451 = vmatprep.subr.bf16.mxu0 %v1418
        %1452 = vmatpush1.bf16.xpose.msra.mxu0 %v1417
        %1453 = vmatprep.subr.bf16.mxu0 %v1420
        %1454 = vmatpush1.bf16.xpose.msra.mxu0 %v1419
        %1455 = vmatprep.subr.bf16.mxu0 %v1422
        %1456 = vmatpush1.bf16.xpose.msra.mxu0 %v1421
        %1457 = vmatprep.mubr.bf16.mxu0 %v1424
        %1458 = vmatmul.mubr.bf16.gmra.mrb[0].mxu0 %v1423
        %v1459 = vpop.f32.mrb[0].mxu0
        %v1460 = vadd.f32 0.0, %v1459
        %v1461 = vpop.f32.mrb[0].mxu0
        %v1462 = vadd.f32 0.0, %v1461
        %v1463 = vpop.f32.mrb[0].mxu0
        %v1464 = vadd.f32 0.0, %v1463
        %v1465 = vpop.f32.mrb[0].mxu0
        %v1466 = vadd.f32 0.0, %v1465
        %1467 = vdwg.mxu0
        %v1468 = vld [vmem:[%s4] sm:$0xf]
        %v1469 = vld [vmem:[%s4 + $0x4] sm:$0xf]
        %v1470 = vpack.c.bf16 %v1464, %v1460
        %v1471 = vpack.c.bf16 %v1466, %v1462
        %v1472 = vld [vmem:[%s5] sm:$0xff]
        %v1473 = vld [vmem:[%s5 + $0x8] sm:$0xff]
        %1475 = vset.pattern.permute.xlu0 0
        %1476 = vperm.xlu0 %1475, %v1472
        %v1477 = vpop.permute.xlu0 %1476
        %1480 = vset.pattern.permute.xlu0 0
        %1481 = vperm.xlu0 %1480, %v1473
        %v1482 = vpop.permute.xlu0 %1481
        %v1486 = vunpack.c.l.b16 %v1468
        %v1487 = vunpack.c.l.b16 %v1469
        %v1488 = vpack.c.b16 %v1487, %v1486
        %v1490 = vsel %vm669, %v1488, 0
        %1492 = vmatprep.subr.bf16.mxu0 %v1471
        %1493 = vmatpush1.bf16.msra.mxu0 %v1470
        %1494 = vmatprep.subr.bf16.mxu0 0
        %1495 = vmatpush1.bf16.msra.mxu0 0
        %1496 = vmatprep.subr.bf16.mxu0 0
        %1497 = vmatpush1.bf16.msra.mxu0 0
        %1498 = vmatprep.subr.bf16.mxu0 0
        %1499 = vmatpush1.bf16.msra.mxu0 0
        %1500 = vmatprep.subr.bf16.mxu0 0
        %1501 = vmatpush1.bf16.msra.mxu0 0
        %1502 = vmatprep.subr.bf16.mxu0 0
        %1503 = vmatpush1.bf16.msra.mxu0 0
        %1504 = vmatprep.subr.bf16.mxu0 0
        %1505 = vmatpush1.bf16.msra.mxu0 0
        %1506 = vmatprep.subr.bf16.mxu0 0
        %1507 = vmatpush1.bf16.msra.mxu0 0
        %1508 = vmatprep.subr.bf16.mxu0 0
        %1509 = vmatpush1.bf16.msra.mxu0 0
        %1510 = vmatprep.subr.bf16.mxu0 0
        %1511 = vmatpush1.bf16.msra.mxu0 0
        %1512 = vmatprep.subr.bf16.mxu0 0
        %1513 = vmatpush1.bf16.msra.mxu0 0
        %1514 = vmatprep.subr.bf16.mxu0 0
        %1515 = vmatpush1.bf16.msra.mxu0 0
        %1516 = vmatprep.subr.bf16.mxu0 0
        %1517 = vmatpush1.bf16.msra.mxu0 0
        %1518 = vmatprep.subr.bf16.mxu0 0
        %1519 = vmatpush1.bf16.msra.mxu0 0
        %1520 = vmatprep.subr.bf16.mxu0 0
        %1521 = vmatpush1.bf16.msra.mxu0 0
        %1522 = vmatprep.subr.bf16.mxu0 0
        %1523 = vmatpush1.bf16.msra.mxu0 0
        %1524 = vmatprep.mubr.bf16.mxu0 0
        %1525 = vmatmul.mubr.bf16.gmra.mrb[0].mxu0 %v1490
        %v1526 = vpop.f32.mrb[0].mxu0
        %v1527 = vadd.f32 %v1477, %v1526
        %v1528 = vpop.f32.mrb[0].mxu0
        %v1529 = vadd.f32 %v1477, %v1528
        %v1530 = vpop.f32.mrb[0].mxu0
        %v1531 = vadd.f32 %v1482, %v1530
        %v1532 = vpop.f32.mrb[0].mxu0
        %v1533 = vadd.f32 %v1482, %v1532
        %1534 = vdwg.mxu0
        %s1535 = smul.addr %s629, 8
        %s1536 = scalar_lea.vmem %s263, %s1535
        %v1537 = vld [vmem:[%s1536] sm:$0xff]
        %v1538 = vld [vmem:[%s1536 + $0x8] sm:$0xff]
        %v1539 = vld [vmem:[%s1536 + $0x10] sm:$0xff]
        %v1540 = vld [vmem:[%s1536 + $0x18] sm:$0xff]
        %v1541 = vadd.f32 %v1537, %v1527
        %v1542 = vadd.f32 %v1538, %v1529
        %v1543 = vadd.f32 %v1539, %v1531
        %v1544 = vadd.f32 %v1540, %v1533
        %1545 = vst [vmem:[%s258] sm:$0xff] %v1541
        %1546 = vst [vmem:[%s258 + $0x8] sm:$0xff] %v1542
        %1547 = vst [vmem:[%s258 + $0x10] sm:$0xff] %v1543
        %1548 = vst [vmem:[%s258 + $0x18] sm:$0xff] %v1544
        %s1549 = sand.u32 %s173, 1
        %s1550 = scalar_lea.sflag [#allocation6], %s1549
        %s1551 = sand.u32 %s173, 1
        %s1552 = smul.addr %s1551, 32
        %s1553 = scalar_lea.vmem [#allocation5], %s1552
        // Predicated region
        $region49: #{tpu_custom_call.1} parent=43 // pred_check
          %p1554 = pneg %p183
        $region50: #{tpu_custom_call.1} parent=43 // pred_check_branch
          %1556 = sbr.rel (%p1554) target = $region52
        $region51: #{tpu_custom_call.1} parent=43 // pred_region
          %s1557 = smul.u32 2, %s25
          %s1559 = ssub.s32 512, 512
          %1560 = vsyncadd %s1550, %s1559
          %s1561 = smul.addr %s24, 4
          %s1562 = sadd.s32 %s1557, %s1561
          %s1563 = smul.addr %s1562, 128
          %s1564 = scalar_lea.hbm %s6, %s1563
          %s1565 = sshll.u32 %s1553, 4
          %s1566 = int_to_ptr.vmem [resolvable:$true] %s1565
          %1571 = dma.vmem_to_hbm [thread:$0]  %s1566, 512, %s1564, %s1550, 256, 256, 16
        $region52: #{tpu_custom_call.1} parent=43 // pred_fallthru
          _
      $region44: #{tpu_custom_call.1} parent=5 // pred_fallthru
        _
      %p1572 = scmp.le.s32.totalorder 2, %s15
      // Predicated region
      $region53: #{tpu_custom_call.1} parent=5 // pred_check
        %p1573 = pneg %p1572
      $region54: #{tpu_custom_call.1} parent=5 // pred_check_branch
        %1575 = sbr.rel (%p1573) target = $region56
      $region55: #{tpu_custom_call.1} parent=5 // pred_region
        %s1576 = ssub.s32 %s15, 2
        // Predicated region
        $region57: #{tpu_custom_call.1} parent=55 // pred_check
          %p1577 = pneg %p189
        $region58: #{tpu_custom_call.1} parent=55 // pred_check_branch
          %1579 = sbr.rel (%p1577) target = $region60
        $region59: #{tpu_custom_call.1} parent=55 // pred_region
          %s1580 = sand.u32 %s174, 1
          %s1581 = scalar_lea.sflag [#allocation6], %s1580
          %s1582 = sand.u32 %s174, 1
          %s1583 = smul.addr %s1582, 32
          %s1584 = scalar_lea.vmem [#allocation5], %s1583
          %1585 = dma.done %s1581, 512
        $region60: #{tpu_custom_call.1} parent=55 // pred_fallthru
          _
      $region56: #{tpu_custom_call.1} parent=5 // pred_fallthru
        _
    $region6: #{tpu_custom_call.1} parent=1 // loop_footer
      %s19 = sadd.s32 1, %s15
    $region7: #{tpu_custom_call.1} parent=1 // loop_footer_branch
      %14 = sbr.rel target = $region3
    $region8: #{tpu_custom_call.1} parent=1 // loop_exit
      _
    %1586 = vsyncpa [#allocation6], 1
    %s1587 = scalar_lea.sflag [#allocation6], 1
    %1588 = vsyncpa %s1587, 1

</llo_original>
